<compile_context>
chip_gen: v7x
topology: tpu7x:2x2x1
jax: 0.10.0
libtpu: 0.0.40
codegen_flags: <defaults>
</compile_context>

<pallas_src>
import functools

import numpy as np

import jax
import jax.numpy as jnp
from jax import lax
from jax.experimental import pallas as pl
from jax.experimental.pallas import tpu as pltpu


_BN_EPS = 1e-5


def _silu(y):
    # y * sigmoid(y); the approximate reciprocal rides the EUP slot.
    return y * pl.reciprocal(1.0 + jnp.exp(-y), approx=True)


# ----------------------------------------------------------------------------
# The fused C2f kernel (one grid step = one pack of `nb` batch images)
# ----------------------------------------------------------------------------
def _c2f_kernel(x_ref, wy0_ref, wy1_ref, by0_ref, by1_ref,
                wm_ref, bm_ref, wc2_ref, bc2_ref, o_ref, tpad_ref,
                *, H, n_bn, add_residual):
    L = tpad_ref.shape[1]                       # nb * W * c lanes (bottleneck)

    # Zero only the two halo rows of the conv scratch; rows 1..H are always
    # overwritten before each conv (review: no full-buffer zero store).
    tpad_ref[0:1, :] = jnp.zeros((1, L), tpad_ref.dtype)
    tpad_ref[H + 1:H + 2, :] = jnp.zeros((1, L), tpad_ref.dtype)

    xb = x_ref[...]                             # (H, nb*W*Ci) bf16

    # ---- cv1 (1x1) emitted directly as its two channel chunks, so the
    # torch .chunk(2, 1) never becomes a lane slice / HBM copy. ----
    y0 = _silu(jnp.dot(xb, wy0_ref[...],
                       preferred_element_type=jnp.float32) + by0_ref[...])
    y1 = _silu(jnp.dot(xb, wy1_ref[...],
                       preferred_element_type=jnp.float32) + by1_ref[...])
    ys = [y0, y1]

    # ---- n Bottlenecks: (3x3 conv -> SiLU) x2 (+ residual), all in VMEM.
    # Each 3x3 conv = 3 row-shifted GEMMs against banded weight matrices that
    # fold the kw taps and column zero-padding; the 1-row halo is handled by
    # the zeroed edge rows of tpad_ref (no HBM pad). ----
    cur = y1
    for i in range(n_bn):
        prev = cur
        for j in range(2):
            # TODO(synk): the kh slices below start at sublane offsets 1/2
            # (not 8-aligned); Mosaic may materialize small per-tap VMEM
            # copies.  A pltpu.roll formulation does not lower cleanly at
            # this (H+2)=18-row size, so the copies are accepted here.
            tpad_ref[1:1 + H, :] = cur.astype(tpad_ref.dtype)
            acc = jnp.zeros((H, L), jnp.float32)
            for kh in range(3):
                acc += jnp.dot(tpad_ref[kh:kh + H, :],
                               wm_ref[(i * 2 + j) * 3 + kh],
                               preferred_element_type=jnp.float32)
            cur = _silu(acc + bm_ref[i * 2 + j])
        if add_residual:
            cur = cur + prev
        ys.append(cur)

    # ---- cv2 (1x1) over the "concatenated" chunks, realised as a sum of
    # per-chunk GEMMs (no jnp.concatenate, no extra HBM pass). ----
    acc = jnp.zeros(o_ref.shape, jnp.float32)
    for q, yq in enumerate(ys):
        acc += jnp.dot(yq.astype(jnp.bfloat16), wc2_ref[q],
                       preferred_element_type=jnp.float32)
    o_ref[...] = _silu(acc + bc2_ref[...]).astype(o_ref.dtype)


# ----------------------------------------------------------------------------
# Host-side weight packing (BN folded, lane-block layouts)
# Lane convention: lane = (b * W + w) * C + ch for image-in-pack b, column w.
# ----------------------------------------------------------------------------
def _fold_bn_affine(key, co):
    k1, k2, k3, k4 = jax.random.split(key, 4)
    gamma = 1.0 + 0.1 * jax.random.normal(k1, (co,), jnp.float32)
    beta = 0.1 * jax.random.normal(k2, (co,), jnp.float32)
    mean = 0.1 * jax.random.normal(k3, (co,), jnp.float32)
    var = 1.0 + 0.1 * jax.random.uniform(k4, (co,), jnp.float32)
    scale = gamma / jnp.sqrt(var + _BN_EPS)       # inference BN -> affine
    bias = beta - mean * scale
    return np.asarray(scale), np.asarray(bias)


def _make_1x1(key, ci, co):
    kw_key, kb_key = jax.random.split(key)
    w = 0.1 * np.asarray(jax.random.normal(kw_key, (ci, co), jnp.float32))
    scale, bias = _fold_bn_affine(kb_key, co)
    return w * scale[None, :], bias               # BN scale folded into W


def _make_3x3(key, ci, co):
    kw_key, kb_key = jax.random.split(key)
    w = 0.1 * np.asarray(jax.random.normal(kw_key, (3, 3, ci, co), jnp.float32))
    scale, bias = _fold_bn_affine(kb_key, co)
    return w * scale[None, None, None, :], bias


def _blockdiag_1x1(w_io, nb, width):
    """(Ci, Co) -> block-diagonal (nb*width*Ci, nb*width*Co)."""
    ci, co = w_io.shape
    m = np.zeros((nb * width * ci, nb * width * co), np.float32)
    for p in range(nb * width):
        m[p * ci:(p + 1) * ci, p * co:(p + 1) * co] = w_io
    return m


def _banded_3x3(w_hwio, nb, width):
    """(3, 3, Ci, Co) -> (3, nb*width*Ci, nb*width*Co) banded matrices that
    apply all kw taps (and column zero-padding) as one GEMM per kh tap;
    block-diagonal over the nb packed images (no cross-image mixing)."""
    _, _, ci, co = w_hwio.shape
    m = np.zeros((3, nb * width * ci, nb * width * co), np.float32)
    for kh in range(3):
        for kw in range(3):
            for b in range(nb):
                for w in range(width):
                    sw = w + kw - 1
                    if 0 <= sw < width:
                        r = (b * width + sw) * ci
                        cc = (b * width + w) * co
                        m[kh, r:r + ci, cc:cc + co] = w_hwio[kh, kw]
    return m


def _tile_bias(bias, nb, width):
    return np.tile(bias, nb * width).reshape(1, -1)


def init_c2f_params(key, c1, c2, n=1, shortcut=False, e=0.5, *, N, W):
    assert n >= 1
    c = int(c2 * e)

    # Batch-pack factor: push the narrowest lane stream (W*c) toward >=128
    # lanes while staying a divisor of the batch size.
    target = max(1, -(-128 // (W * c)))           # ceil(128 / (W*c))
    nb = 1
    for d in range(1, N + 1):
        if N % d == 0 and d <= target:
            nb = d

    keys = jax.random.split(key, 2 + 2 * n)
    w_cv1, b_cv1 = _make_1x1(keys[0], c1, 2 * c)
    w_cv2, b_cv2 = _make_1x1(keys[1], (2 + n) * c, c2)
    m_raw = []
    for i in range(n):
        m_raw.append((_make_3x3(keys[2 + 2 * i], c, c),
                      _make_3x3(keys[3 + 2 * i], c, c)))

    # Packed kernel operands.
    wy0 = _blockdiag_1x1(w_cv1[:, :c], nb, W)
    wy1 = _blockdiag_1x1(w_cv1[:, c:], nb, W)
    by0 = _tile_bias(b_cv1[:c], nb, W)
    by1 = _tile_bias(b_cv1[c:], nb, W)

    wm_list, bm_list = [], []
    for (wa, ba), (wb, bb) in m_raw:
        for w_, b_ in ((wa, ba), (wb, bb)):
            wm_list.append(_banded_3x3(w_, nb, W))
            bm_list.append(_tile_bias(b_, nb, W))
    wm = np.concatenate(wm_list, axis=0)          # (n*2*3, L, L)
    bm = np.stack(bm_list, axis=0)                # (n*2, 1, L)

    wc2 = np.stack([_blockdiag_1x1(w_cv2[q * c:(q + 1) * c, :], nb, W)
                    for q in range(2 + n)], axis=0)   # (2+n, L, L2)
    bc2 = _tile_bias(b_cv2, nb, W)                # (1, L2)

    return {
        "c": c, "c2": c2, "n": n, "nb": nb, "add": bool(shortcut),
        "wy0": jnp.asarray(wy0, jnp.bfloat16),
        "wy1": jnp.asarray(wy1, jnp.bfloat16),
        "by0": jnp.asarray(by0, jnp.float32),
        "by1": jnp.asarray(by1, jnp.float32),
        "wm": jnp.asarray(wm, jnp.bfloat16),
        "bm": jnp.asarray(bm, jnp.float32),
        "wc2": jnp.asarray(wc2, jnp.bfloat16),
        "bc2": jnp.asarray(bc2, jnp.float32),
        # Raw (BN-folded, f32) weights for the pure-JAX reference check.
        "ref": {
            "w_cv1": jnp.asarray(w_cv1, jnp.float32),
            "b_cv1": jnp.asarray(b_cv1, jnp.float32),
            "w_cv2": jnp.asarray(w_cv2, jnp.float32),
            "b_cv2": jnp.asarray(b_cv2, jnp.float32),
            "m": [((jnp.asarray(wa, jnp.float32), jnp.asarray(ba, jnp.float32)),
                   (jnp.asarray(wb, jnp.float32), jnp.asarray(bb, jnp.float32)))
                  for (wa, ba), (wb, bb) in m_raw],
        },
    }


# ----------------------------------------------------------------------------
# C2f forward (one pallas_call; only boundary layout transposes stay in XLA)
# ----------------------------------------------------------------------------
def c2f_forward(x_nchw, p):
    N, Ci, H, W = x_nchw.shape
    nb, c, c2, n = p["nb"], p["c"], p["c2"], p["n"]
    G = N // nb
    Lin, L, L2 = nb * W * Ci, nb * W * c, nb * W * c2

    # NCHW -> (G, H, nb*W*Ci) lane-packed bf16 (halves HBM bytes of the only
    # activation stream that still touches HBM).
    x = jnp.transpose(x_nchw, (0, 2, 3, 1)).reshape(G, nb, H, W * Ci)
    x = jnp.transpose(x, (0, 2, 1, 3)).reshape(G, H, Lin).astype(jnp.bfloat16)

    kern = functools.partial(_c2f_kernel, H=H, n_bn=n, add_residual=p["add"])
    out = pl.pallas_call(
        kern,
        out_shape=jax.ShapeDtypeStruct((G, H, L2), jnp.float32),
        grid_spec=pltpu.PrefetchScalarGridSpec(
            num_scalar_prefetch=0,
            grid=(G,),
            in_specs=[
                pl.BlockSpec((None, H, Lin), lambda g: (g, 0, 0)),
                pl.BlockSpec((Lin, L), lambda g: (0, 0)),
                pl.BlockSpec((Lin, L), lambda g: (0, 0)),
                pl.BlockSpec((1, L), lambda g: (0, 0)),
                pl.BlockSpec((1, L), lambda g: (0, 0)),
                pl.BlockSpec((2 * n * 3, L, L), lambda g: (0, 0, 0)),
                pl.BlockSpec((2 * n, 1, L), lambda g: (0, 0, 0)),
                pl.BlockSpec((2 + n, L, L2), lambda g: (0, 0, 0)),
                pl.BlockSpec((1, L2), lambda g: (0, 0)),
            ],
            out_specs=pl.BlockSpec((None, H, L2), lambda g: (g, 0, 0)),
            scratch_shapes=[pltpu.VMEM((H + 2, L), jnp.bfloat16)],
        ),
        compiler_params=pltpu.CompilerParams(
            dimension_semantics=("parallel",)),
    )(x, p["wy0"], p["wy1"], p["by0"], p["by1"],
      p["wm"], p["bm"], p["wc2"], p["bc2"])

    # (G, H, nb*W*c2) -> NCHW
    out = out.reshape(G, H, nb, W, c2)
    return jnp.transpose(out, (0, 2, 4, 1, 3)).reshape(N, c2, H, W)


# ----------------------------------------------------------------------------
# Pure-JAX reference (f32) for a tolerance check
# ----------------------------------------------------------------------------
def _ref_conv1x1(x, w, b):
    return jax.nn.silu(jnp.einsum("nhwi,io->nhwo", x, w) + b)


def _ref_conv3x3(x, w, b):
    y = lax.conv_general_dilated(x, w, (1, 1), "SAME",
                                 dimension_numbers=("NHWC", "HWIO", "NHWC"))
    return jax.nn.silu(y + b)


def c2f_reference(x_nchw, p):
    r = p["ref"]
    x = jnp.transpose(x_nchw, (0, 2, 3, 1))
    y = _ref_conv1x1(x, r["w_cv1"], r["b_cv1"])
    c = p["c"]
    ys = [y[..., :c], y[..., c:]]
    for (wa, ba), (wb, bb) in r["m"]:
        t = _ref_conv3x3(ys[-1], wa, ba)
        u = _ref_conv3x3(t, wb, bb)
        if p["add"]:
            u = u + ys[-1]
        ys.append(u)
    out = _ref_conv1x1(jnp.concatenate(ys, axis=-1), r["w_cv2"], r["b_cv2"])
    return jnp.transpose(out, (0, 3, 1, 2))


if __name__ == "__main__":
    key = jax.random.PRNGKey(0)
    kx, kp = jax.random.split(key)

    c1, c2, n = 4, 4, 1
    N, H, W = 2, 16, 16
    x = jax.random.normal(kx, (N, c1, H, W), jnp.float32)   # NCHW, like torch
    params = init_c2f_params(kp, c1, c2, n=n, shortcut=False, e=0.5, N=N, W=W)

    fwd = jax.jit(functools.partial(c2f_forward, p=params))
    out = fwd(x)
    jax.block_until_ready(out)

    assert out.shape == (N, c2, H, W), out.shape
    assert bool(jnp.all(jnp.isfinite(out)))

    # bf16 weights/activations + approx reciprocal in SiLU -> loose tolerance.
    ref = c2f_reference(x, params)
    max_err = float(jnp.max(jnp.abs(out - ref)))
    assert max_err < 3e-2, max_err
    print("KERNEL_OK")
</pallas_src>

<mosaic_0001>
module attributes {stable_mosaic.version = 11 : i64} {
  func.func @_c2f_kernel(%arg0: i32, %arg1: memref<1x16x128xbf16, #tpu.memory_space<vmem>>, %arg2: memref<128x64xbf16, #tpu.memory_space<vmem>>, %arg3: memref<128x64xbf16, #tpu.memory_space<vmem>>, %arg4: memref<1x64xf32, #tpu.memory_space<vmem>>, %arg5: memref<1x64xf32, #tpu.memory_space<vmem>>, %arg6: memref<6x64x64xbf16, #tpu.memory_space<vmem>>, %arg7: memref<2x1x64xf32, #tpu.memory_space<vmem>>, %arg8: memref<3x64x128xbf16, #tpu.memory_space<vmem>>, %arg9: memref<1x128xf32, #tpu.memory_space<vmem>>, %arg10: memref<1x16x128xf32, #tpu.memory_space<vmem>>, %arg11: memref<18x64xbf16, #tpu.memory_space<vmem>>) attributes {dimension_semantics = [#tpu.dimension_semantics<parallel>], iteration_bounds = array<i64: 1>, scalar_prefetch = 0 : i64, scratch_operands = 1 : i64, tpu.core_type = #tpu.core_type<tc>, window_params = [{transform_indices = @transform_0, window_bounds = array<i64: 1, 16, 128>}, {pipeline_mode = #tpu.pipeline_mode<synchronous>, transform_indices = @transform_1, window_bounds = array<i64: 128, 64>}, {pipeline_mode = #tpu.pipeline_mode<synchronous>, transform_indices = @transform_2, window_bounds = array<i64: 128, 64>}, {pipeline_mode = #tpu.pipeline_mode<synchronous>, transform_indices = @transform_3, window_bounds = array<i64: 1, 64>}, {pipeline_mode = #tpu.pipeline_mode<synchronous>, transform_indices = @transform_4, window_bounds = array<i64: 1, 64>}, {pipeline_mode = #tpu.pipeline_mode<synchronous>, transform_indices = @transform_5, window_bounds = array<i64: 6, 64, 64>}, {pipeline_mode = #tpu.pipeline_mode<synchronous>, transform_indices = @transform_6, window_bounds = array<i64: 2, 1, 64>}, {pipeline_mode = #tpu.pipeline_mode<synchronous>, transform_indices = @transform_7, window_bounds = array<i64: 3, 64, 128>}, {pipeline_mode = #tpu.pipeline_mode<synchronous>, transform_indices = @transform_8, window_bounds = array<i64: 1, 128>}, {transform_indices = @transform_9, window_bounds = array<i64: 1, 16, 128>}]} {
    %cst = arith.constant 0.000000e+00 : bf16
    %0 = vector.broadcast %cst : bf16 to vector<1x64xbf16>
    %c0 = arith.constant 0 : index
    %c0_0 = arith.constant 0 : index
    %1 = vector.load %arg11[%c0, %c0_0] : memref<18x64xbf16, #tpu.memory_space<vmem>>, vector<1x64xbf16>
    tpu.vector_store %arg11[%c0, %c0_0], %0 {strides = array<i32>} : memref<18x64xbf16, #tpu.memory_space<vmem>>, vector<1x64xbf16>,
    %cst_1 = arith.constant 0.000000e+00 : bf16
    %2 = vector.broadcast %cst_1 : bf16 to vector<1x64xbf16>
    %c17 = arith.constant 17 : index
    %c0_2 = arith.constant 0 : index
    %3 = vector.load %arg11[%c17, %c0_2] : memref<18x64xbf16, #tpu.memory_space<vmem>>, vector<1x64xbf16>
    tpu.vector_store %arg11[%c17, %c0_2], %2 {strides = array<i32>} : memref<18x64xbf16, #tpu.memory_space<vmem>>, vector<1x64xbf16>,
    %c0_3 = arith.constant 0 : index
    %c0_4 = arith.constant 0 : index
    %c0_5 = arith.constant 0 : index
    %4 = vector.load %arg1[%c0_3, %c0_4, %c0_5] : memref<1x16x128xbf16, #tpu.memory_space<vmem>>, vector<1x16x128xbf16>
    %5 = vector.shape_cast %4 : vector<1x16x128xbf16> to vector<16x128xbf16>
    %c0_6 = arith.constant 0 : index
    %c0_7 = arith.constant 0 : index
    %6 = vector.load %arg2[%c0_6, %c0_7] : memref<128x64xbf16, #tpu.memory_space<vmem>>, vector<128x64xbf16>
    %cst_8 = arith.constant dense<0.000000e+00> : vector<16x64xf32>
    %7 = tpu.matmul %5, %6, %cst_8 {dimension_numbers = #tpu.dot_dimension_numbers<[1], [0], [0], [1], [0, 0, 1, 1], [], []>} : vector<16x128xbf16>, vector<128x64xbf16>, vector<16x64xf32> -> vector<16x64xf32>
    %c0_9 = arith.constant 0 : index
    %c0_10 = arith.constant 0 : index
    %8 = vector.load %arg4[%c0_9, %c0_10] : memref<1x64xf32, #tpu.memory_space<vmem>>, vector<1x64xf32>
    %9 = vector.broadcast %8 : vector<1x64xf32> to vector<16x64xf32>
    %10 = arith.addf %7, %9 : vector<16x64xf32>
    %cst_11 = arith.constant 0.000000e+00 : f32
    %11 = vector.broadcast %cst_11 : f32 to vector<16x64xf32>
    %12 = arith.subf %11, %10 : vector<16x64xf32>
    %13 = math.exp %12 : vector<16x64xf32>
    %cst_12 = arith.constant 1.000000e+00 : f32
    %14 = vector.broadcast %cst_12 : f32 to vector<16x64xf32>
    %15 = arith.addf %14, %13 : vector<16x64xf32>
    %16 = tpu.reciprocal %15 {approx = true} : vector<16x64xf32> -> vector<16x64xf32>
    %17 = arith.mulf %10, %16 : vector<16x64xf32>
    %c0_13 = arith.constant 0 : index
    %c0_14 = arith.constant 0 : index
    %18 = vector.load %arg3[%c0_13, %c0_14] : memref<128x64xbf16, #tpu.memory_space<vmem>>, vector<128x64xbf16>
    %cst_15 = arith.constant dense<0.000000e+00> : vector<16x64xf32>
    %19 = tpu.matmul %5, %18, %cst_15 {dimension_numbers = #tpu.dot_dimension_numbers<[1], [0], [0], [1], [0, 0, 1, 1], [], []>} : vector<16x128xbf16>, vector<128x64xbf16>, vector<16x64xf32> -> vector<16x64xf32>
    %c0_16 = arith.constant 0 : index
    %c0_17 = arith.constant 0 : index
    %20 = vector.load %arg5[%c0_16, %c0_17] : memref<1x64xf32, #tpu.memory_space<vmem>>, vector<1x64xf32>
    %21 = vector.broadcast %20 : vector<1x64xf32> to vector<16x64xf32>
    %22 = arith.addf %19, %21 : vector<16x64xf32>
    %cst_18 = arith.constant 0.000000e+00 : f32
    %23 = vector.broadcast %cst_18 : f32 to vector<16x64xf32>
    %24 = arith.subf %23, %22 : vector<16x64xf32>
    %25 = math.exp %24 : vector<16x64xf32>
    %cst_19 = arith.constant 1.000000e+00 : f32
    %26 = vector.broadcast %cst_19 : f32 to vector<16x64xf32>
    %27 = arith.addf %26, %25 : vector<16x64xf32>
    %28 = tpu.reciprocal %27 {approx = true} : vector<16x64xf32> -> vector<16x64xf32>
    %29 = arith.mulf %22, %28 : vector<16x64xf32>
    %30 = arith.truncf %29 : vector<16x64xf32> to vector<16x64xbf16>
    %c1 = arith.constant 1 : index
    %c0_20 = arith.constant 0 : index
    %31 = vector.load %arg11[%c1, %c0_20] : memref<18x64xbf16, #tpu.memory_space<vmem>>, vector<16x64xbf16>
    tpu.vector_store %arg11[%c1, %c0_20], %30 {strides = array<i32>} : memref<18x64xbf16, #tpu.memory_space<vmem>>, vector<16x64xbf16>,
    %cst_21 = arith.constant 0.000000e+00 : f32
    %32 = vector.broadcast %cst_21 : f32 to vector<16x64xf32>
    %c0_22 = arith.constant 0 : index
    %c0_23 = arith.constant 0 : index
    %33 = vector.load %arg11[%c0_22, %c0_23] : memref<18x64xbf16, #tpu.memory_space<vmem>>, vector<16x64xbf16>
    %c0_24 = arith.constant 0 : index
    %c0_25 = arith.constant 0 : index
    %c0_26 = arith.constant 0 : index
    %34 = vector.load %arg6[%c0_24, %c0_25, %c0_26] : memref<6x64x64xbf16, #tpu.memory_space<vmem>>, vector<1x64x64xbf16>
    %35 = vector.shape_cast %34 : vector<1x64x64xbf16> to vector<64x64xbf16>
    %cst_27 = arith.constant dense<0.000000e+00> : vector<16x64xf32>
    %36 = tpu.matmul %33, %35, %cst_27 {dimension_numbers = #tpu.dot_dimension_numbers<[1], [0], [0], [1], [0, 0, 1, 1], [], []>} : vector<16x64xbf16>, vector<64x64xbf16>, vector<16x64xf32> -> vector<16x64xf32>
    %37 = arith.addf %32, %36 : vector<16x64xf32>
    %c1_28 = arith.constant 1 : index
    %c0_29 = arith.constant 0 : index
    %38 = vector.load %arg11[%c1_28, %c0_29] : memref<18x64xbf16, #tpu.memory_space<vmem>>, vector<16x64xbf16>
    %c1_30 = arith.constant 1 : index
    %c0_31 = arith.constant 0 : index
    %c0_32 = arith.constant 0 : index
    %39 = vector.load %arg6[%c1_30, %c0_31, %c0_32] : memref<6x64x64xbf16, #tpu.memory_space<vmem>>, vector<1x64x64xbf16>
    %40 = vector.shape_cast %39 : vector<1x64x64xbf16> to vector<64x64xbf16>
    %cst_33 = arith.constant dense<0.000000e+00> : vector<16x64xf32>
    %41 = tpu.matmul %38, %40, %cst_33 {dimension_numbers = #tpu.dot_dimension_numbers<[1], [0], [0], [1], [0, 0, 1, 1], [], []>} : vector<16x64xbf16>, vector<64x64xbf16>, vector<16x64xf32> -> vector<16x64xf32>
    %42 = arith.addf %37, %41 : vector<16x64xf32>
    %c2 = arith.constant 2 : index
    %c0_34 = arith.constant 0 : index
    %43 = vector.load %arg11[%c2, %c0_34] : memref<18x64xbf16, #tpu.memory_space<vmem>>, vector<16x64xbf16>
    %c2_35 = arith.constant 2 : index
    %c0_36 = arith.constant 0 : index
    %c0_37 = arith.constant 0 : index
    %44 = vector.load %arg6[%c2_35, %c0_36, %c0_37] : memref<6x64x64xbf16, #tpu.memory_space<vmem>>, vector<1x64x64xbf16>
    %45 = vector.shape_cast %44 : vector<1x64x64xbf16> to vector<64x64xbf16>
    %cst_38 = arith.constant dense<0.000000e+00> : vector<16x64xf32>
    %46 = tpu.matmul %43, %45, %cst_38 {dimension_numbers = #tpu.dot_dimension_numbers<[1], [0], [0], [1], [0, 0, 1, 1], [], []>} : vector<16x64xbf16>, vector<64x64xbf16>, vector<16x64xf32> -> vector<16x64xf32>
    %47 = arith.addf %42, %46 : vector<16x64xf32>
    %c0_39 = arith.constant 0 : index
    %c0_40 = arith.constant 0 : index
    %c0_41 = arith.constant 0 : index
    %48 = vector.load %arg7[%c0_39, %c0_40, %c0_41] : memref<2x1x64xf32, #tpu.memory_space<vmem>>, vector<1x1x64xf32>
    %49 = vector.shape_cast %48 : vector<1x1x64xf32> to vector<1x64xf32>
    %50 = vector.broadcast %49 : vector<1x64xf32> to vector<16x64xf32>
    %51 = arith.addf %47, %50 : vector<16x64xf32>
    %cst_42 = arith.constant 0.000000e+00 : f32
    %52 = vector.broadcast %cst_42 : f32 to vector<16x64xf32>
    %53 = arith.subf %52, %51 : vector<16x64xf32>
    %54 = math.exp %53 : vector<16x64xf32>
    %cst_43 = arith.constant 1.000000e+00 : f32
    %55 = vector.broadcast %cst_43 : f32 to vector<16x64xf32>
    %56 = arith.addf %55, %54 : vector<16x64xf32>
    %57 = tpu.reciprocal %56 {approx = true} : vector<16x64xf32> -> vector<16x64xf32>
    %58 = arith.mulf %51, %57 : vector<16x64xf32>
    %59 = arith.truncf %58 : vector<16x64xf32> to vector<16x64xbf16>
    %c1_44 = arith.constant 1 : index
    %c0_45 = arith.constant 0 : index
    %60 = vector.load %arg11[%c1_44, %c0_45] : memref<18x64xbf16, #tpu.memory_space<vmem>>, vector<16x64xbf16>
    tpu.vector_store %arg11[%c1_44, %c0_45], %59 {strides = array<i32>} : memref<18x64xbf16, #tpu.memory_space<vmem>>, vector<16x64xbf16>,
    %cst_46 = arith.constant 0.000000e+00 : f32
    %61 = vector.broadcast %cst_46 : f32 to vector<16x64xf32>
    %c0_47 = arith.constant 0 : index
    %c0_48 = arith.constant 0 : index
    %62 = vector.load %arg11[%c0_47, %c0_48] : memref<18x64xbf16, #tpu.memory_space<vmem>>, vector<16x64xbf16>
    %c3 = arith.constant 3 : index
    %c0_49 = arith.constant 0 : index
    %c0_50 = arith.constant 0 : index
    %63 = vector.load %arg6[%c3, %c0_49, %c0_50] : memref<6x64x64xbf16, #tpu.memory_space<vmem>>, vector<1x64x64xbf16>
    %64 = vector.shape_cast %63 : vector<1x64x64xbf16> to vector<64x64xbf16>
    %cst_51 = arith.constant dense<0.000000e+00> : vector<16x64xf32>
    %65 = tpu.matmul %62, %64, %cst_51 {dimension_numbers = #tpu.dot_dimension_numbers<[1], [0], [0], [1], [0, 0, 1, 1], [], []>} : vector<16x64xbf16>, vector<64x64xbf16>, vector<16x64xf32> -> vector<16x64xf32>
    %66 = arith.addf %61, %65 : vector<16x64xf32>
    %c1_52 = arith.constant 1 : index
    %c0_53 = arith.constant 0 : index
    %67 = vector.load %arg11[%c1_52, %c0_53] : memref<18x64xbf16, #tpu.memory_space<vmem>>, vector<16x64xbf16>
    %c4 = arith.constant 4 : index
    %c0_54 = arith.constant 0 : index
    %c0_55 = arith.constant 0 : index
    %68 = vector.load %arg6[%c4, %c0_54, %c0_55] : memref<6x64x64xbf16, #tpu.memory_space<vmem>>, vector<1x64x64xbf16>
    %69 = vector.shape_cast %68 : vector<1x64x64xbf16> to vector<64x64xbf16>
    %cst_56 = arith.constant dense<0.000000e+00> : vector<16x64xf32>
    %70 = tpu.matmul %67, %69, %cst_56 {dimension_numbers = #tpu.dot_dimension_numbers<[1], [0], [0], [1], [0, 0, 1, 1], [], []>} : vector<16x64xbf16>, vector<64x64xbf16>, vector<16x64xf32> -> vector<16x64xf32>
    %71 = arith.addf %66, %70 : vector<16x64xf32>
    %c2_57 = arith.constant 2 : index
    %c0_58 = arith.constant 0 : index
    %72 = vector.load %arg11[%c2_57, %c0_58] : memref<18x64xbf16, #tpu.memory_space<vmem>>, vector<16x64xbf16>
    %c5 = arith.constant 5 : index
    %c0_59 = arith.constant 0 : index
    %c0_60 = arith.constant 0 : index
    %73 = vector.load %arg6[%c5, %c0_59, %c0_60] : memref<6x64x64xbf16, #tpu.memory_space<vmem>>, vector<1x64x64xbf16>
    %74 = vector.shape_cast %73 : vector<1x64x64xbf16> to vector<64x64xbf16>
    %cst_61 = arith.constant dense<0.000000e+00> : vector<16x64xf32>
    %75 = tpu.matmul %72, %74, %cst_61 {dimension_numbers = #tpu.dot_dimension_numbers<[1], [0], [0], [1], [0, 0, 1, 1], [], []>} : vector<16x64xbf16>, vector<64x64xbf16>, vector<16x64xf32> -> vector<16x64xf32>
    %76 = arith.addf %71, %75 : vector<16x64xf32>
    %c1_62 = arith.constant 1 : index
    %c0_63 = arith.constant 0 : index
    %c0_64 = arith.constant 0 : index
    %77 = vector.load %arg7[%c1_62, %c0_63, %c0_64] : memref<2x1x64xf32, #tpu.memory_space<vmem>>, vector<1x1x64xf32>
    %78 = vector.shape_cast %77 : vector<1x1x64xf32> to vector<1x64xf32>
    %79 = vector.broadcast %78 : vector<1x64xf32> to vector<16x64xf32>
    %80 = arith.addf %76, %79 : vector<16x64xf32>
    %cst_65 = arith.constant 0.000000e+00 : f32
    %81 = vector.broadcast %cst_65 : f32 to vector<16x64xf32>
    %82 = arith.subf %81, %80 : vector<16x64xf32>
    %83 = math.exp %82 : vector<16x64xf32>
    %cst_66 = arith.constant 1.000000e+00 : f32
    %84 = vector.broadcast %cst_66 : f32 to vector<16x64xf32>
    %85 = arith.addf %84, %83 : vector<16x64xf32>
    %86 = tpu.reciprocal %85 {approx = true} : vector<16x64xf32> -> vector<16x64xf32>
    %87 = arith.mulf %80, %86 : vector<16x64xf32>
    %cst_67 = arith.constant 0.000000e+00 : f32
    %88 = vector.broadcast %cst_67 : f32 to vector<16x128xf32>
    %89 = arith.truncf %17 : vector<16x64xf32> to vector<16x64xbf16>
    %c0_68 = arith.constant 0 : index
    %c0_69 = arith.constant 0 : index
    %c0_70 = arith.constant 0 : index
    %90 = vector.load %arg8[%c0_68, %c0_69, %c0_70] : memref<3x64x128xbf16, #tpu.memory_space<vmem>>, vector<1x64x128xbf16>
    %91 = vector.shape_cast %90 : vector<1x64x128xbf16> to vector<64x128xbf16>
    %cst_71 = arith.constant dense<0.000000e+00> : vector<16x128xf32>
    %92 = tpu.matmul %89, %91, %cst_71 {dimension_numbers = #tpu.dot_dimension_numbers<[1], [0], [0], [1], [0, 0, 1, 1], [], []>} : vector<16x64xbf16>, vector<64x128xbf16>, vector<16x128xf32> -> vector<16x128xf32>
    %93 = arith.addf %88, %92 : vector<16x128xf32>
    %94 = arith.truncf %29 : vector<16x64xf32> to vector<16x64xbf16>
    %c1_72 = arith.constant 1 : index
    %c0_73 = arith.constant 0 : index
    %c0_74 = arith.constant 0 : index
    %95 = vector.load %arg8[%c1_72, %c0_73, %c0_74] : memref<3x64x128xbf16, #tpu.memory_space<vmem>>, vector<1x64x128xbf16>
    %96 = vector.shape_cast %95 : vector<1x64x128xbf16> to vector<64x128xbf16>
    %cst_75 = arith.constant dense<0.000000e+00> : vector<16x128xf32>
    %97 = tpu.matmul %94, %96, %cst_75 {dimension_numbers = #tpu.dot_dimension_numbers<[1], [0], [0], [1], [0, 0, 1, 1], [], []>} : vector<16x64xbf16>, vector<64x128xbf16>, vector<16x128xf32> -> vector<16x128xf32>
    %98 = arith.addf %93, %97 : vector<16x128xf32>
    %99 = arith.truncf %87 : vector<16x64xf32> to vector<16x64xbf16>
    %c2_76 = arith.constant 2 : index
    %c0_77 = arith.constant 0 : index
    %c0_78 = arith.constant 0 : index
    %100 = vector.load %arg8[%c2_76, %c0_77, %c0_78] : memref<3x64x128xbf16, #tpu.memory_space<vmem>>, vector<1x64x128xbf16>
    %101 = vector.shape_cast %100 : vector<1x64x128xbf16> to vector<64x128xbf16>
    %cst_79 = arith.constant dense<0.000000e+00> : vector<16x128xf32>
    %102 = tpu.matmul %99, %101, %cst_79 {dimension_numbers = #tpu.dot_dimension_numbers<[1], [0], [0], [1], [0, 0, 1, 1], [], []>} : vector<16x64xbf16>, vector<64x128xbf16>, vector<16x128xf32> -> vector<16x128xf32>
    %103 = arith.addf %98, %102 : vector<16x128xf32>
    %c0_80 = arith.constant 0 : index
    %c0_81 = arith.constant 0 : index
    %104 = vector.load %arg9[%c0_80, %c0_81] : memref<1x128xf32, #tpu.memory_space<vmem>>, vector<1x128xf32>
    %105 = vector.broadcast %104 : vector<1x128xf32> to vector<16x128xf32>
    %106 = arith.addf %103, %105 : vector<16x128xf32>
    %cst_82 = arith.constant 0.000000e+00 : f32
    %107 = vector.broadcast %cst_82 : f32 to vector<16x128xf32>
    %108 = arith.subf %107, %106 : vector<16x128xf32>
    %109 = math.exp %108 : vector<16x128xf32>
    %cst_83 = arith.constant 1.000000e+00 : f32
    %110 = vector.broadcast %cst_83 : f32 to vector<16x128xf32>
    %111 = arith.addf %110, %109 : vector<16x128xf32>
    %112 = tpu.reciprocal %111 {approx = true} : vector<16x128xf32> -> vector<16x128xf32>
    %113 = arith.mulf %106, %112 : vector<16x128xf32>
    %c0_84 = arith.constant 0 : index
    %c0_85 = arith.constant 0 : index
    %c0_86 = arith.constant 0 : index
    %114 = vector.load %arg10[%c0_84, %c0_85, %c0_86] : memref<1x16x128xf32, #tpu.memory_space<vmem>>, vector<1x16x128xf32>
    %115 = vector.shape_cast %114 : vector<1x16x128xf32> to vector<16x128xf32>
    %116 = vector.shape_cast %113 : vector<16x128xf32> to vector<1x16x128xf32>
    tpu.vector_store %arg10[%c0_84, %c0_85, %c0_86], %116 {strides = array<i32>} : memref<1x16x128xf32, #tpu.memory_space<vmem>>, vector<1x16x128xf32>,
    return
  }
  func.func @transform_0(%arg0: i32) -> (i32, i32, i32) {
    %c0_i32 = arith.constant 0 : i32
    %c0_i32_0 = arith.constant 0 : i32
    %c0_i32_1 = arith.constant 0 : i32
    return %arg0, %c0_i32, %c0_i32_0 : i32, i32, i32
  }
  func.func @transform_1(%arg0: i32) -> (i32, i32) {
    %c0_i32 = arith.constant 0 : i32
    %c0_i32_0 = arith.constant 0 : i32
    %c0_i32_1 = arith.constant 0 : i32
    return %c0_i32, %c0_i32_0 : i32, i32
  }
  func.func @transform_2(%arg0: i32) -> (i32, i32) {
    %c0_i32 = arith.constant 0 : i32
    %c0_i32_0 = arith.constant 0 : i32
    %c0_i32_1 = arith.constant 0 : i32
    return %c0_i32, %c0_i32_0 : i32, i32
  }
  func.func @transform_3(%arg0: i32) -> (i32, i32) {
    %c0_i32 = arith.constant 0 : i32
    %c0_i32_0 = arith.constant 0 : i32
    %c0_i32_1 = arith.constant 0 : i32
    return %c0_i32, %c0_i32_0 : i32, i32
  }
  func.func @transform_4(%arg0: i32) -> (i32, i32) {
    %c0_i32 = arith.constant 0 : i32
    %c0_i32_0 = arith.constant 0 : i32
    %c0_i32_1 = arith.constant 0 : i32
    return %c0_i32, %c0_i32_0 : i32, i32
  }
  func.func @transform_5(%arg0: i32) -> (i32, i32, i32) {
    %c0_i32 = arith.constant 0 : i32
    %c0_i32_0 = arith.constant 0 : i32
    %c0_i32_1 = arith.constant 0 : i32
    %c0_i32_2 = arith.constant 0 : i32
    return %c0_i32, %c0_i32_0, %c0_i32_1 : i32, i32, i32
  }
  func.func @transform_6(%arg0: i32) -> (i32, i32, i32) {
    %c0_i32 = arith.constant 0 : i32
    %c0_i32_0 = arith.constant 0 : i32
    %c0_i32_1 = arith.constant 0 : i32
    %c0_i32_2 = arith.constant 0 : i32
    return %c0_i32, %c0_i32_0, %c0_i32_1 : i32, i32, i32
  }
  func.func @transform_7(%arg0: i32) -> (i32, i32, i32) {
    %c0_i32 = arith.constant 0 : i32
    %c0_i32_0 = arith.constant 0 : i32
    %c0_i32_1 = arith.constant 0 : i32
    %c0_i32_2 = arith.constant 0 : i32
    return %c0_i32, %c0_i32_0, %c0_i32_1 : i32, i32, i32
  }
  func.func @transform_8(%arg0: i32) -> (i32, i32) {
    %c0_i32 = arith.constant 0 : i32
    %c0_i32_0 = arith.constant 0 : i32
    %c0_i32_1 = arith.constant 0 : i32
    return %c0_i32, %c0_i32_0 : i32, i32
  }
  func.func @transform_9(%arg0: i32) -> (i32, i32, i32) {
    %c0_i32 = arith.constant 0 : i32
    %c0_i32_0 = arith.constant 0 : i32
    %c0_i32_1 = arith.constant 0 : i32
    return %arg0, %c0_i32, %c0_i32_0 : i32, i32, i32
  }
}

</mosaic_0001>

<llo_original>
// kernel: c2f_forward.1
$region0: #{c2f_forward.1}
  #allocation0 [shape = 'u32[]', space=smem, size = 0x4, offset = 0x4, fixed_abs, tag = 'smem constant byte address 0x4 - core index']
  #allocation1 [shape = 'u32[144,128]{1,0:T(1,128)}', space=vmem, size = 0x12000, scoped, tag = 'internal scratch']
  #allocation2 [shape = 'bf16[18,64]{1,0:T(8,128)(2,1)}', space=vmem, size = 0x1800, scoped, tag = 'scratch operand']
  %s0 = inlined_call_operand.vmem [shape: bf16[1,16,128], index: 0, kind: input, shape index: {}]
  %s1 = inlined_call_operand.vmem [shape: bf16[128,64], index: 1, kind: input, shape index: {}]
  %s2 = inlined_call_operand.vmem [shape: bf16[128,64], index: 2, kind: input, shape index: {}]
  %s3 = inlined_call_operand.hbm [shape: f32[1,64], index: 3, kind: input, shape index: {}]
  %s4 = inlined_call_operand.hbm [shape: f32[1,64], index: 4, kind: input, shape index: {}]
  %s5 = inlined_call_operand.vmem [shape: bf16[6,64,64], index: 5, kind: input, shape index: {}]
  %s6 = inlined_call_operand.vmem [shape: f32[2,1,64], index: 6, kind: input, shape index: {}]
  %s7 = inlined_call_operand.vmem [shape: bf16[3,64,128], index: 7, kind: input, shape index: {}]
  %s8 = inlined_call_operand.vmem [shape: f32[1,128], index: 8, kind: input, shape index: {}]
  %s9 = inlined_call_operand.vmem [shape: f32[1,16,128], index: 9, kind: output, shape index: {}]
  %s10 = sld [smem:[#allocation0]]
  $region54: #{c2f_forward.1} parent=0
    _
  %s12 = ssub.s32 1, %s10
  %s13 = scalar_select 0, %s12, %s10
  $region1: #{c2f_forward.1} parent=0
    #allocation3 [shape = 'u8[512]{0}', space=vmem, size = 0x400, scoped, tag = 'input window, operand 3, single buffered']
    #allocation4 [shape = 's32[1]{0}', space=sflag, size = 0x4, scoped, tag = 'scoped memory for c2f_forward.1']
    #allocation5 [shape = 'u8[512]{0}', space=vmem, size = 0x400, scoped, tag = 'input window, operand 4, single buffered']
    #allocation6 [shape = 's32[1]{0}', space=sflag, size = 0x4, scoped, tag = 'scoped memory for c2f_forward.1']
    %14 = vsyncpa [#allocation4], 0
    %15 = vsyncpa [#allocation6], 0
    // Predicated region
    $region2: #{c2f_forward.1} parent=1 // pred_check
      _
    $region3: #{c2f_forward.1} parent=1 // pred_check_branch
      %17 = sbr.rel (0) target = $region5
    $region4: #{c2f_forward.1} parent=1 // pred_region
      _
    $region5: #{c2f_forward.1} parent=1 // pred_fallthru
      _
    // Predicated region
    $region6: #{c2f_forward.1} parent=1 // pred_check
      _
    $region7: #{c2f_forward.1} parent=1 // pred_check_branch
      %19 = sbr.rel (0) target = $region9
    $region8: #{c2f_forward.1} parent=1 // pred_region
      _
    $region9: #{c2f_forward.1} parent=1 // pred_fallthru
      _
    // Predicated region
    $region10: #{c2f_forward.1} parent=1 // pred_check
      _
    $region11: #{c2f_forward.1} parent=1 // pred_check_branch
      %21 = sbr.rel (0) target = $region13
    $region12: #{c2f_forward.1} parent=1 // pred_region
      _
    $region13: #{c2f_forward.1} parent=1 // pred_fallthru
      _
    // Predicated region
    $region14: #{c2f_forward.1} parent=1 // pred_check
      _
    $region15: #{c2f_forward.1} parent=1 // pred_check_branch
      %23 = sbr.rel (0) target = $region17
    $region16: #{c2f_forward.1} parent=1 // pred_region
      %s25 = ssub.s32 16, 16
      %26 = vsyncadd [#allocation4], %s25
      %s28 = sshll.u32 [#allocation3], 4
      %s29 = int_to_ptr.vmem [resolvable:$true] %s28
      %31 = dma.hbm_to_vmem [thread:$0]  %s3, 16, %s29, [#allocation4]
    $region17: #{c2f_forward.1} parent=1 // pred_fallthru
      _
    // Predicated region
    $region18: #{c2f_forward.1} parent=1 // pred_check
      _
    $region19: #{c2f_forward.1} parent=1 // pred_check_branch
      %33 = sbr.rel (0) target = $region21
    $region20: #{c2f_forward.1} parent=1 // pred_region
      %s35 = ssub.s32 16, 16
      %36 = vsyncadd [#allocation6], %s35
      %s38 = sshll.u32 [#allocation5], 4
      %s39 = int_to_ptr.vmem [resolvable:$true] %s38
      %41 = dma.hbm_to_vmem [thread:$0]  %s4, 16, %s39, [#allocation6]
    $region21: #{c2f_forward.1} parent=1 // pred_fallthru
      _
    // Predicated region
    $region22: #{c2f_forward.1} parent=1 // pred_check
      _
    $region23: #{c2f_forward.1} parent=1 // pred_check_branch
      %43 = sbr.rel (0) target = $region25
    $region24: #{c2f_forward.1} parent=1 // pred_region
      _
    $region25: #{c2f_forward.1} parent=1 // pred_fallthru
      _
    // Predicated region
    $region26: #{c2f_forward.1} parent=1 // pred_check
      _
    $region27: #{c2f_forward.1} parent=1 // pred_check_branch
      %45 = sbr.rel (0) target = $region29
    $region28: #{c2f_forward.1} parent=1 // pred_region
      _
    $region29: #{c2f_forward.1} parent=1 // pred_fallthru
      _
    // Predicated region
    $region30: #{c2f_forward.1} parent=1 // pred_check
      _
    $region31: #{c2f_forward.1} parent=1 // pred_check_branch
      %47 = sbr.rel (0) target = $region33
    $region32: #{c2f_forward.1} parent=1 // pred_region
      _
    $region33: #{c2f_forward.1} parent=1 // pred_fallthru
      _
    // Predicated region
    $region34: #{c2f_forward.1} parent=1 // pred_check
      _
    $region35: #{c2f_forward.1} parent=1 // pred_check_branch
      %49 = sbr.rel (0) target = $region37
    $region36: #{c2f_forward.1} parent=1 // pred_region
      _
    $region37: #{c2f_forward.1} parent=1 // pred_fallthru
      _
    // Predicated region
    $region38: #{c2f_forward.1} parent=1 // pred_check
      _
    $region39: #{c2f_forward.1} parent=1 // pred_check_branch
      %51 = sbr.rel (0) target = $region41
    $region40: #{c2f_forward.1} parent=1 // pred_region
      %52 = dma.done [#allocation4], 16
    $region41: #{c2f_forward.1} parent=1 // pred_fallthru
      _
    // Predicated region
    $region42: #{c2f_forward.1} parent=1 // pred_check
      _
    $region43: #{c2f_forward.1} parent=1 // pred_check_branch
      %54 = sbr.rel (0) target = $region45
    $region44: #{c2f_forward.1} parent=1 // pred_region
      %55 = dma.done [#allocation6], 16
    $region45: #{c2f_forward.1} parent=1 // pred_fallthru
      _
    %vm57 = vcmask 516096
    %vm58 = vsmask.f32 256
    %vm59 = vmand %vm57, %vm58
    %v60 = vld [vmem:[#allocation2] sm:$0x1]
    %v61 = vsel %vm59, 0, %v60
    %62 = vst [vmem:[#allocation2] sm:$0x1] %v61
    %vm63 = vsmask.f32 7938
    %vm64 = vmand %vm57, %vm63
    %v65 = vld [vmem:[#allocation2 + $0x8] sm:$0x1]
    %v66 = vsel %vm64, 0, %v65
    %67 = vst [vmem:[#allocation2 + $0x8] sm:$0x1] %v66
    %v68 = vld [vmem:[%s0] sm:$0xf]
    %v69 = vld [vmem:[%s0 + $0x4] sm:$0xf]
    %v70 = vld [vmem:[%s1] sm:$0xf]
    %v71 = vld [vmem:[%s1 + $0x4] sm:$0xf]
    %v72 = vld [vmem:[%s1 + $0x8] sm:$0xf]
    %v73 = vld [vmem:[%s1 + $0xc] sm:$0xf]
    %v74 = vld [vmem:[%s1 + $0x10] sm:$0xf]
    %v75 = vld [vmem:[%s1 + $0x14] sm:$0xf]
    %v76 = vld [vmem:[%s1 + $0x18] sm:$0xf]
    %v77 = vld [vmem:[%s1 + $0x1c] sm:$0xf]
    %v78 = vld [vmem:[%s1 + $0x20] sm:$0xf]
    %v79 = vld [vmem:[%s1 + $0x24] sm:$0xf]
    %v80 = vld [vmem:[%s1 + $0x28] sm:$0xf]
    %v81 = vld [vmem:[%s1 + $0x2c] sm:$0xf]
    %v82 = vld [vmem:[%s1 + $0x30] sm:$0xf]
    %v83 = vld [vmem:[%s1 + $0x34] sm:$0xf]
    %v84 = vld [vmem:[%s1 + $0x38] sm:$0xf]
    %v85 = vld [vmem:[%s1 + $0x3c] sm:$0xf]
    %v86 = vld [vmem:[#allocation3] sm:$0x1]
    %v88 = vlaneseq
    %v89 = vshrl.u32 %v88, 7
    %v90 = vsub.s32 0, %v89
    %v91 = vrot.slane %v86, %v90
    %v95 = vunpack.c.l.b16 %v68
    %v96 = vunpack.c.l.b16 %v69
    %v97 = vpack.c.b16 %v96, %v95
    %v115 = vunpack.c.l.b16 %v70
    %v116 = vunpack.c.l.b16 %v71
    %v117 = vunpack.c.l.b16 %v72
    %v118 = vunpack.c.l.b16 %v73
    %v119 = vunpack.c.l.b16 %v74
    %v120 = vunpack.c.l.b16 %v75
    %v121 = vunpack.c.l.b16 %v76
    %v122 = vunpack.c.l.b16 %v77
    %v123 = vunpack.c.l.b16 %v78
    %v124 = vunpack.c.l.b16 %v79
    %v125 = vunpack.c.l.b16 %v80
    %v126 = vunpack.c.l.b16 %v81
    %v127 = vunpack.c.l.b16 %v82
    %v128 = vunpack.c.l.b16 %v83
    %v129 = vunpack.c.l.b16 %v84
    %v130 = vunpack.c.l.b16 %v85
    %v131 = vpack.c.b16 %v116, %v115
    %v132 = vpack.c.b16 %v118, %v117
    %v133 = vpack.c.b16 %v120, %v119
    %v134 = vpack.c.b16 %v122, %v121
    %v135 = vpack.c.b16 %v124, %v123
    %v136 = vpack.c.b16 %v126, %v125
    %v137 = vpack.c.b16 %v128, %v127
    %v138 = vpack.c.b16 %v130, %v129
    %147 = vmatprep.subr.bf16.mxu0 0
    %148 = vmatpush1.bf16.msra.mxu0 %v131
    %149 = vmatprep.subr.bf16.mxu0 0
    %150 = vmatpush1.bf16.msra.mxu0 %v132
    %151 = vmatprep.subr.bf16.mxu0 0
    %152 = vmatpush1.bf16.msra.mxu0 %v133
    %153 = vmatprep.subr.bf16.mxu0 0
    %154 = vmatpush1.bf16.msra.mxu0 %v134
    %155 = vmatprep.subr.bf16.mxu0 0
    %156 = vmatpush1.bf16.msra.mxu0 %v135
    %157 = vmatprep.subr.bf16.mxu0 0
    %158 = vmatpush1.bf16.msra.mxu0 %v136
    %159 = vmatprep.subr.bf16.mxu0 0
    %160 = vmatpush1.bf16.msra.mxu0 %v137
    %161 = vmatprep.subr.bf16.mxu0 0
    %162 = vmatpush1.bf16.msra.mxu0 %v138
    %163 = vmatprep.subr.bf16.mxu0 0
    %164 = vmatpush1.bf16.msra.mxu0 0
    %165 = vmatprep.subr.bf16.mxu0 0
    %166 = vmatpush1.bf16.msra.mxu0 0
    %167 = vmatprep.subr.bf16.mxu0 0
    %168 = vmatpush1.bf16.msra.mxu0 0
    %169 = vmatprep.subr.bf16.mxu0 0
    %170 = vmatpush1.bf16.msra.mxu0 0
    %171 = vmatprep.subr.bf16.mxu0 0
    %172 = vmatpush1.bf16.msra.mxu0 0
    %173 = vmatprep.subr.bf16.mxu0 0
    %174 = vmatpush1.bf16.msra.mxu0 0
    %175 = vmatprep.subr.bf16.mxu0 0
    %176 = vmatpush1.bf16.msra.mxu0 0
    %177 = vmatprep.subr.bf16.mxu0 0
    %178 = vmatpush1.bf16.msra.mxu0 0
    %179 = vmatprep.mubr.bf16.mxu0 0
    %180 = vmatmul.mubr.bf16.gmra.mrb[0].mxu0 %v97
    %v181 = vpop.f32.mrb[0].mxu0
    %v182 = vadd.f32 %v91, %v181
    %v183 = vpop.f32.mrb[0].mxu0
    %v184 = vpop.f32.mrb[0].mxu0
    %v185 = vadd.f32 %v91, %v184
    %v186 = vpop.f32.mrb[0].mxu0
    %187 = vdwg.mxu0
    %v188 = vsub.f32 0.0, %v182
    %v189 = vsub.f32 0.0, %v185
    %v190 = vmul.f32 %v188, 1.442695
    %v191 = vpow.pop %v190
    %v192 = vmul.f32 %v189, 1.442695
    %v193 = vpow.pop %v192
    %v194 = vadd.f32 %v191, 1.0
    %v195 = vadd.f32 %v193, 1.0
    %v196 = vrcp.pop %v194
    %v197 = vrcp.pop %v195
    %v198 = vmul.f32 %v182, %v196
    %v199 = vmul.f32 %v185, %v197
    %v200 = vld [vmem:[%s2] sm:$0xf]
    %v201 = vld [vmem:[%s2 + $0x4] sm:$0xf]
    %v202 = vld [vmem:[%s2 + $0x8] sm:$0xf]
    %v203 = vld [vmem:[%s2 + $0xc] sm:$0xf]
    %v204 = vld [vmem:[%s2 + $0x10] sm:$0xf]
    %v205 = vld [vmem:[%s2 + $0x14] sm:$0xf]
    %v206 = vld [vmem:[%s2 + $0x18] sm:$0xf]
    %v207 = vld [vmem:[%s2 + $0x1c] sm:$0xf]
    %v208 = vld [vmem:[%s2 + $0x20] sm:$0xf]
    %v209 = vld [vmem:[%s2 + $0x24] sm:$0xf]
    %v210 = vld [vmem:[%s2 + $0x28] sm:$0xf]
    %v211 = vld [vmem:[%s2 + $0x2c] sm:$0xf]
    %v212 = vld [vmem:[%s2 + $0x30] sm:$0xf]
    %v213 = vld [vmem:[%s2 + $0x34] sm:$0xf]
    %v214 = vld [vmem:[%s2 + $0x38] sm:$0xf]
    %v215 = vld [vmem:[%s2 + $0x3c] sm:$0xf]
    %v216 = vld [vmem:[#allocation5] sm:$0x1]
    %v218 = vlaneseq
    %v219 = vshrl.u32 %v218, 7
    %v220 = vsub.s32 0, %v219
    %v221 = vrot.slane %v216, %v220
    %v239 = vunpack.c.l.b16 %v200
    %v240 = vunpack.c.l.b16 %v201
    %v241 = vunpack.c.l.b16 %v202
    %v242 = vunpack.c.l.b16 %v203
    %v243 = vunpack.c.l.b16 %v204
    %v244 = vunpack.c.l.b16 %v205
    %v245 = vunpack.c.l.b16 %v206
    %v246 = vunpack.c.l.b16 %v207
    %v247 = vunpack.c.l.b16 %v208
    %v248 = vunpack.c.l.b16 %v209
    %v249 = vunpack.c.l.b16 %v210
    %v250 = vunpack.c.l.b16 %v211
    %v251 = vunpack.c.l.b16 %v212
    %v252 = vunpack.c.l.b16 %v213
    %v253 = vunpack.c.l.b16 %v214
    %v254 = vunpack.c.l.b16 %v215
    %v255 = vpack.c.b16 %v240, %v239
    %v256 = vpack.c.b16 %v242, %v241
    %v257 = vpack.c.b16 %v244, %v243
    %v258 = vpack.c.b16 %v246, %v245
    %v259 = vpack.c.b16 %v248, %v247
    %v260 = vpack.c.b16 %v250, %v249
    %v261 = vpack.c.b16 %v252, %v251
    %v262 = vpack.c.b16 %v254, %v253
    %271 = vmatprep.subr.bf16.mxu0 0
    %272 = vmatpush1.bf16.msra.mxu0 %v255
    %273 = vmatprep.subr.bf16.mxu0 0
    %274 = vmatpush1.bf16.msra.mxu0 %v256
    %275 = vmatprep.subr.bf16.mxu0 0
    %276 = vmatpush1.bf16.msra.mxu0 %v257
    %277 = vmatprep.subr.bf16.mxu0 0
    %278 = vmatpush1.bf16.msra.mxu0 %v258
    %279 = vmatprep.subr.bf16.mxu0 0
    %280 = vmatpush1.bf16.msra.mxu0 %v259
    %281 = vmatprep.subr.bf16.mxu0 0
    %282 = vmatpush1.bf16.msra.mxu0 %v260
    %283 = vmatprep.subr.bf16.mxu0 0
    %284 = vmatpush1.bf16.msra.mxu0 %v261
    %285 = vmatprep.subr.bf16.mxu0 0
    %286 = vmatpush1.bf16.msra.mxu0 %v262
    %287 = vmatprep.subr.bf16.mxu0 0
    %288 = vmatpush1.bf16.msra.mxu0 0
    %289 = vmatprep.subr.bf16.mxu0 0
    %290 = vmatpush1.bf16.msra.mxu0 0
    %291 = vmatprep.subr.bf16.mxu0 0
    %292 = vmatpush1.bf16.msra.mxu0 0
    %293 = vmatprep.subr.bf16.mxu0 0
    %294 = vmatpush1.bf16.msra.mxu0 0
    %295 = vmatprep.subr.bf16.mxu0 0
    %296 = vmatpush1.bf16.msra.mxu0 0
    %297 = vmatprep.subr.bf16.mxu0 0
    %298 = vmatpush1.bf16.msra.mxu0 0
    %299 = vmatprep.subr.bf16.mxu0 0
    %300 = vmatpush1.bf16.msra.mxu0 0
    %301 = vmatprep.subr.bf16.mxu0 0
    %302 = vmatpush1.bf16.msra.mxu0 0
    %303 = vmatprep.mubr.bf16.mxu0 0
    %304 = vmatmul.mubr.bf16.gmra.mrb[0].mxu0 %v97
    %v305 = vpop.f32.mrb[0].mxu0
    %v306 = vadd.f32 %v221, %v305
    %v307 = vpop.f32.mrb[0].mxu0
    %v308 = vpop.f32.mrb[0].mxu0
    %v309 = vadd.f32 %v221, %v308
    %v310 = vpop.f32.mrb[0].mxu0
    %311 = vdwg.mxu0
    %v312 = vsub.f32 0.0, %v306
    %v313 = vsub.f32 0.0, %v309
    %v314 = vmul.f32 %v312, 1.442695
    %v315 = vpow.pop %v314
    %v316 = vmul.f32 %v313, 1.442695
    %v317 = vpow.pop %v316
    %v318 = vadd.f32 %v315, 1.0
    %v319 = vadd.f32 %v317, 1.0
    %v320 = vrcp.pop %v318
    %v321 = vrcp.pop %v319
    %v322 = vmul.f32 %v306, %v320
    %v323 = vmul.f32 %v309, %v321
    %v324 = vpack.c.bf16 %v323, %v322
    %v326 = vunpack.c.l.b16 %v324
    %v327 = vunpack.c.h.b16 %v324
    %v328 = vpack.c.b16 %v326, %v326
    %v329 = vpack.c.b16 %v327, %v327
    %vm330 = vsmask.f32 4368
    %vm331 = vmor %vm58, %vm330
    %v333 = vshrl.u32 %v328, 16
    %v335 = vrot.slane %v333, 7
    %v336 = vshll.u32 %v328, 16
    %v338 = vor.u32 %v335, %v336
    %v339 = vrot.slane %v335, 4
    %v341 = vshrl.u32 %v329, 16
    %v343 = vrot.slane %v341, 7
    %v344 = vshll.u32 %v329, 16
    %v346 = vor.u32 %v343, %v344
    %v347 = vsel %vm331, %v339, %v346
    %v348 = vrot.slane %v343, 4
    %vm352 = vcmask 519168
    %vm353 = vmand %vm352, %vm63
    %v354 = vld [vmem:[#allocation2] sm:$0xf]
    %v355 = vsel %vm353, %v338, %v354
    %356 = vst [vmem:[#allocation2] sm:$0xf] %v355
    %vm357 = vcmask 519168
    %358 = vst.msk [vmem:[#allocation2 + $0x4] sm:$0xf] %vm357, %v347
    %v359 = vld [vmem:[#allocation2 + $0x8] sm:$0x1]
    %v360 = vsel %vm59, %v348, %v359
    %361 = vst [vmem:[#allocation2 + $0x8] sm:$0x1] %v360
    %v362 = vld [vmem:[#allocation2] sm:$0xf]
    %v363 = vld [vmem:[#allocation2 + $0x4] sm:$0xf]
    %v364 = vld [vmem:[%s5] sm:$0xf]
    %v365 = vld [vmem:[%s5 + $0x4] sm:$0xf]
    %v366 = vld [vmem:[%s5 + $0x8] sm:$0xf]
    %v367 = vld [vmem:[%s5 + $0xc] sm:$0xf]
    %v368 = vld [vmem:[%s5 + $0x10] sm:$0xf]
    %v369 = vld [vmem:[%s5 + $0x14] sm:$0xf]
    %v370 = vld [vmem:[%s5 + $0x18] sm:$0xf]
    %v371 = vld [vmem:[%s5 + $0x1c] sm:$0xf]
    %v372 = vld [vmem:[#allocation2 + $0x8] sm:$0x1]
    %s373 = scalar_lea.vmem %s5, 32
    %v374 = vld [vmem:[%s373] sm:$0xf]
    %v375 = vld [vmem:[%s373 + $0x4] sm:$0xf]
    %v376 = vld [vmem:[%s373 + $0x8] sm:$0xf]
    %v377 = vld [vmem:[%s373 + $0xc] sm:$0xf]
    %v378 = vld [vmem:[%s373 + $0x10] sm:$0xf]
    %v379 = vld [vmem:[%s373 + $0x14] sm:$0xf]
    %v380 = vld [vmem:[%s373 + $0x18] sm:$0xf]
    %v381 = vld [vmem:[%s373 + $0x1c] sm:$0xf]
    %v385 = vunpack.c.l.b16 %v362
    %v386 = vunpack.c.l.b16 %v363
    %v387 = vunpack.c.l.b16 %v372
    %v388 = vpack.c.b16 %v386, %v385
    %v389 = vpack.c.b16 %v387, %v387
    %vm390 = vsmask.f32 7424
    %v392 = vshrl.u32 %v388, 16
    %v394 = vshll.u32 %v388, 16
    %v396 = vrot.slane %v394, 1
    %v397 = vor.u32 %v392, %v396
    %v399 = vshll.u32 %v389, 16
    %v401 = vrot.slane %v399, 1
    %v402 = vsel %vm390, %v397, %v401
    %v411 = vunpack.c.l.b16 %v374
    %v412 = vunpack.c.l.b16 %v375
    %v413 = vunpack.c.l.b16 %v376
    %v414 = vunpack.c.l.b16 %v377
    %v415 = vunpack.c.l.b16 %v378
    %v416 = vunpack.c.l.b16 %v379
    %v417 = vunpack.c.l.b16 %v380
    %v418 = vunpack.c.l.b16 %v381
    %v419 = vpack.c.b16 %v412, %v411
    %v420 = vpack.c.b16 %v414, %v413
    %v421 = vpack.c.b16 %v416, %v415
    %v422 = vpack.c.b16 %v418, %v417
    %vm427 = vcmask 523264
    %v429 = vsel %vm427, %v402, 0
    %431 = vmatprep.subr.bf16.mxu0 0
    %432 = vmatpush1.bf16.msra.mxu0 %v419
    %433 = vmatprep.subr.bf16.mxu0 0
    %434 = vmatpush1.bf16.msra.mxu0 %v420
    %435 = vmatprep.subr.bf16.mxu0 0
    %436 = vmatpush1.bf16.msra.mxu0 %v421
    %437 = vmatprep.subr.bf16.mxu0 0
    %438 = vmatpush1.bf16.msra.mxu0 %v422
    %439 = vmatprep.subr.bf16.mxu0 0
    %440 = vmatpush1.bf16.msra.mxu0 0
    %441 = vmatprep.subr.bf16.mxu0 0
    %442 = vmatpush1.bf16.msra.mxu0 0
    %443 = vmatprep.subr.bf16.mxu0 0
    %444 = vmatpush1.bf16.msra.mxu0 0
    %445 = vmatprep.subr.bf16.mxu0 0
    %446 = vmatpush1.bf16.msra.mxu0 0
    %447 = vmatprep.subr.bf16.mxu0 0
    %448 = vmatpush1.bf16.msra.mxu0 0
    %449 = vmatprep.subr.bf16.mxu0 0
    %450 = vmatpush1.bf16.msra.mxu0 0
    %451 = vmatprep.subr.bf16.mxu0 0
    %452 = vmatpush1.bf16.msra.mxu0 0
    %453 = vmatprep.subr.bf16.mxu0 0
    %454 = vmatpush1.bf16.msra.mxu0 0
    %455 = vmatprep.subr.bf16.mxu0 0
    %456 = vmatpush1.bf16.msra.mxu0 0
    %457 = vmatprep.subr.bf16.mxu0 0
    %458 = vmatpush1.bf16.msra.mxu0 0
    %459 = vmatprep.subr.bf16.mxu0 0
    %460 = vmatpush1.bf16.msra.mxu0 0
    %461 = vmatprep.subr.bf16.mxu0 0
    %462 = vmatpush1.bf16.msra.mxu0 0
    %463 = vmatprep.mubr.bf16.mxu0 0
    %464 = vmatmul.mubr.bf16.gmra.mrb[0].mxu0 %v429
    %v465 = vpop.f32.mrb[0].mxu0
    %v466 = vadd.f32 0.0, %v465
    %v467 = vpop.f32.mrb[0].mxu0
    %v468 = vpop.f32.mrb[0].mxu0
    %v469 = vadd.f32 0.0, %v468
    %v470 = vpop.f32.mrb[0].mxu0
    %471 = vdwg.mxu0
    %v480 = vunpack.c.l.b16 %v364
    %v481 = vunpack.c.l.b16 %v365
    %v482 = vunpack.c.l.b16 %v366
    %v483 = vunpack.c.l.b16 %v367
    %v484 = vunpack.c.l.b16 %v368
    %v485 = vunpack.c.l.b16 %v369
    %v486 = vunpack.c.l.b16 %v370
    %v487 = vunpack.c.l.b16 %v371
    %v488 = vpack.c.b16 %v481, %v480
    %v489 = vpack.c.b16 %v483, %v482
    %v490 = vpack.c.b16 %v485, %v484
    %v491 = vpack.c.b16 %v487, %v486
    %v496 = vsel %vm427, %v388, 0
    %498 = vmatprep.subr.bf16.mxu0 0
    %499 = vmatpush1.bf16.msra.mxu0 %v488
    %500 = vmatprep.subr.bf16.mxu0 0
    %501 = vmatpush1.bf16.msra.mxu0 %v489
    %502 = vmatprep.subr.bf16.mxu0 0
    %503 = vmatpush1.bf16.msra.mxu0 %v490
    %504 = vmatprep.subr.bf16.mxu0 0
    %505 = vmatpush1.bf16.msra.mxu0 %v491
    %506 = vmatprep.subr.bf16.mxu0 0
    %507 = vmatpush1.bf16.msra.mxu0 0
    %508 = vmatprep.subr.bf16.mxu0 0
    %509 = vmatpush1.bf16.msra.mxu0 0
    %510 = vmatprep.subr.bf16.mxu0 0
    %511 = vmatpush1.bf16.msra.mxu0 0
    %512 = vmatprep.subr.bf16.mxu0 0
    %513 = vmatpush1.bf16.msra.mxu0 0
    %514 = vmatprep.subr.bf16.mxu0 0
    %515 = vmatpush1.bf16.msra.mxu0 0
    %516 = vmatprep.subr.bf16.mxu0 0
    %517 = vmatpush1.bf16.msra.mxu0 0
    %518 = vmatprep.subr.bf16.mxu0 0
    %519 = vmatpush1.bf16.msra.mxu0 0
    %520 = vmatprep.subr.bf16.mxu0 0
    %521 = vmatpush1.bf16.msra.mxu0 0
    %522 = vmatprep.subr.bf16.mxu0 0
    %523 = vmatpush1.bf16.msra.mxu0 0
    %524 = vmatprep.subr.bf16.mxu0 0
    %525 = vmatpush1.bf16.msra.mxu0 0
    %526 = vmatprep.subr.bf16.mxu0 0
    %527 = vmatpush1.bf16.msra.mxu0 0
    %528 = vmatprep.subr.bf16.mxu0 0
    %529 = vmatpush1.bf16.msra.mxu0 0
    %530 = vmatprep.mubr.bf16.mxu0 0
    %531 = vmatmul.mubr.bf16.gmra.mrb[0].mxu0 %v496
    %v532 = vpop.f32.mrb[0].mxu0
    %v533 = vadd.f32 %v466, %v532
    %v534 = vpop.f32.mrb[0].mxu0
    %v535 = vpop.f32.mrb[0].mxu0
    %v536 = vadd.f32 %v469, %v535
    %v537 = vpop.f32.mrb[0].mxu0
    %538 = vdwg.mxu0
    %v539 = vld [vmem:[#allocation2] sm:$0xe]
    %s540 = scalar_lea.vmem %s5, 64
    %v541 = vld [vmem:[%s540] sm:$0xf]
    %v542 = vld [vmem:[%s540 + $0x4] sm:$0xf]
    %v543 = vld [vmem:[%s540 + $0x8] sm:$0xf]
    %v544 = vld [vmem:[%s540 + $0xc] sm:$0xf]
    %v545 = vld [vmem:[%s540 + $0x10] sm:$0xf]
    %v546 = vld [vmem:[%s540 + $0x14] sm:$0xf]
    %v547 = vld [vmem:[%s540 + $0x18] sm:$0xf]
    %v548 = vld [vmem:[%s540 + $0x1c] sm:$0xf]
    %v550 = vunpack.c.l.b16 %v539
    %v551 = vpack.c.b16 %v386, %v550
    %vm552 = vcmask 1046528
    %v553 = vrot.slane %v551, 1
    %v554 = vrot.slane %v389, 1
    %v555 = vsel %vm552, %v553, %v554
    %v564 = vunpack.c.l.b16 %v541
    %v565 = vunpack.c.l.b16 %v542
    %v566 = vunpack.c.l.b16 %v543
    %v567 = vunpack.c.l.b16 %v544
    %v568 = vunpack.c.l.b16 %v545
    %v569 = vunpack.c.l.b16 %v546
    %v570 = vunpack.c.l.b16 %v547
    %v571 = vunpack.c.l.b16 %v548
    %v572 = vpack.c.b16 %v565, %v564
    %v573 = vpack.c.b16 %v567, %v566
    %v574 = vpack.c.b16 %v569, %v568
    %v575 = vpack.c.b16 %v571, %v570
    %v581 = vsel %vm427, %v555, 0
    %583 = vmatprep.subr.bf16.mxu0 0
    %584 = vmatpush1.bf16.msra.mxu0 %v572
    %585 = vmatprep.subr.bf16.mxu0 0
    %586 = vmatpush1.bf16.msra.mxu0 %v573
    %587 = vmatprep.subr.bf16.mxu0 0
    %588 = vmatpush1.bf16.msra.mxu0 %v574
    %589 = vmatprep.subr.bf16.mxu0 0
    %590 = vmatpush1.bf16.msra.mxu0 %v575
    %591 = vmatprep.subr.bf16.mxu0 0
    %592 = vmatpush1.bf16.msra.mxu0 0
    %593 = vmatprep.subr.bf16.mxu0 0
    %594 = vmatpush1.bf16.msra.mxu0 0
    %595 = vmatprep.subr.bf16.mxu0 0
    %596 = vmatpush1.bf16.msra.mxu0 0
    %597 = vmatprep.subr.bf16.mxu0 0
    %598 = vmatpush1.bf16.msra.mxu0 0
    %599 = vmatprep.subr.bf16.mxu0 0
    %600 = vmatpush1.bf16.msra.mxu0 0
    %601 = vmatprep.subr.bf16.mxu0 0
    %602 = vmatpush1.bf16.msra.mxu0 0
    %603 = vmatprep.subr.bf16.mxu0 0
    %604 = vmatpush1.bf16.msra.mxu0 0
    %605 = vmatprep.subr.bf16.mxu0 0
    %606 = vmatpush1.bf16.msra.mxu0 0
    %607 = vmatprep.subr.bf16.mxu0 0
    %608 = vmatpush1.bf16.msra.mxu0 0
    %609 = vmatprep.subr.bf16.mxu0 0
    %610 = vmatpush1.bf16.msra.mxu0 0
    %611 = vmatprep.subr.bf16.mxu0 0
    %612 = vmatpush1.bf16.msra.mxu0 0
    %613 = vmatprep.subr.bf16.mxu0 0
    %614 = vmatpush1.bf16.msra.mxu0 0
    %615 = vmatprep.mubr.bf16.mxu0 0
    %616 = vmatmul.mubr.bf16.gmra.mrb[0].mxu0 %v581
    %v617 = vpop.f32.mrb[0].mxu0
    %v618 = vadd.f32 0.0, %v617
    %v619 = vpop.f32.mrb[0].mxu0
    %v620 = vpop.f32.mrb[0].mxu0
    %v621 = vadd.f32 0.0, %v620
    %v622 = vpop.f32.mrb[0].mxu0
    %623 = vdwg.mxu0
    %v624 = vadd.f32 %v533, %v618
    %v625 = vadd.f32 %v536, %v621
    %v626 = vld [vmem:[%s6] sm:$0x1]
    %v628 = vlaneseq
    %v629 = vshrl.u32 %v628, 7
    %v630 = vsub.s32 0, %v629
    %v631 = vrot.slane %v626, %v630
    %v633 = vadd.f32 %v624, %v631
    %v634 = vadd.f32 %v625, %v631
    %v635 = vsub.f32 0.0, %v633
    %v636 = vsub.f32 0.0, %v634
    %v637 = vmul.f32 %v635, 1.442695
    %v638 = vpow.pop %v637
    %v639 = vmul.f32 %v636, 1.442695
    %v640 = vpow.pop %v639
    %v641 = vadd.f32 %v638, 1.0
    %v642 = vadd.f32 %v640, 1.0
    %v643 = vrcp.pop %v641
    %v644 = vrcp.pop %v642
    %v645 = vmul.f32 %v633, %v643
    %v646 = vmul.f32 %v634, %v644
    %v647 = vpack.c.bf16 %v646, %v645
    %v649 = vunpack.c.l.b16 %v647
    %v650 = vunpack.c.h.b16 %v647
    %v651 = vpack.c.b16 %v649, %v649
    %v652 = vpack.c.b16 %v650, %v650
    %v654 = vshrl.u32 %v651, 16
    %v656 = vrot.slane %v654, 7
    %v657 = vshll.u32 %v651, 16
    %v659 = vor.u32 %v656, %v657
    %v660 = vrot.slane %v656, 4
    %v662 = vshrl.u32 %v652, 16
    %v664 = vrot.slane %v662, 7
    %v665 = vshll.u32 %v652, 16
    %v667 = vor.u32 %v664, %v665
    %v668 = vsel %vm331, %v660, %v667
    %v669 = vrot.slane %v664, 4
    %v673 = vsel %vm353, %v659, %v362
    %674 = vst [vmem:[#allocation2] sm:$0xf] %v673
    %675 = vst.msk [vmem:[#allocation2 + $0x4] sm:$0xf] %vm357, %v668
    %v676 = vld [vmem:[#allocation2 + $0x8] sm:$0x1]
    %v677 = vsel %vm59, %v669, %v676
    %678 = vst [vmem:[#allocation2 + $0x8] sm:$0x1] %v677
    %v679 = vld [vmem:[#allocation2] sm:$0xf]
    %v680 = vld [vmem:[#allocation2 + $0x4] sm:$0xf]
    %s681 = scalar_lea.vmem %s5, 96
    %v682 = vld [vmem:[%s681] sm:$0xf]
    %v683 = vld [vmem:[%s681 + $0x4] sm:$0xf]
    %v684 = vld [vmem:[%s681 + $0x8] sm:$0xf]
    %v685 = vld [vmem:[%s681 + $0xc] sm:$0xf]
    %v686 = vld [vmem:[%s681 + $0x10] sm:$0xf]
    %v687 = vld [vmem:[%s681 + $0x14] sm:$0xf]
    %v688 = vld [vmem:[%s681 + $0x18] sm:$0xf]
    %v689 = vld [vmem:[%s681 + $0x1c] sm:$0xf]
    %v690 = vld [vmem:[#allocation2 + $0x8] sm:$0x1]
    %s691 = scalar_lea.vmem %s5, 128
    %v692 = vld [vmem:[%s691] sm:$0xf]
    %v693 = vld [vmem:[%s691 + $0x4] sm:$0xf]
    %v694 = vld [vmem:[%s691 + $0x8] sm:$0xf]
    %v695 = vld [vmem:[%s691 + $0xc] sm:$0xf]
    %v696 = vld [vmem:[%s691 + $0x10] sm:$0xf]
    %v697 = vld [vmem:[%s691 + $0x14] sm:$0xf]
    %v698 = vld [vmem:[%s691 + $0x18] sm:$0xf]
    %v699 = vld [vmem:[%s691 + $0x1c] sm:$0xf]
    %v703 = vunpack.c.l.b16 %v679
    %v704 = vunpack.c.l.b16 %v680
    %v705 = vunpack.c.l.b16 %v690
    %v706 = vpack.c.b16 %v704, %v703
    %v707 = vpack.c.b16 %v705, %v705
    %v709 = vshrl.u32 %v706, 16
    %v711 = vshll.u32 %v706, 16
    %v713 = vrot.slane %v711, 1
    %v714 = vor.u32 %v709, %v713
    %v716 = vshll.u32 %v707, 16
    %v718 = vrot.slane %v716, 1
    %v719 = vsel %vm390, %v714, %v718
    %v728 = vunpack.c.l.b16 %v692
    %v729 = vunpack.c.l.b16 %v693
    %v730 = vunpack.c.l.b16 %v694
    %v731 = vunpack.c.l.b16 %v695
    %v732 = vunpack.c.l.b16 %v696
    %v733 = vunpack.c.l.b16 %v697
    %v734 = vunpack.c.l.b16 %v698
    %v735 = vunpack.c.l.b16 %v699
    %v736 = vpack.c.b16 %v729, %v728
    %v737 = vpack.c.b16 %v731, %v730
    %v738 = vpack.c.b16 %v733, %v732
    %v739 = vpack.c.b16 %v735, %v734
    %v745 = vsel %vm427, %v719, 0
    %747 = vmatprep.subr.bf16.mxu0 0
    %748 = vmatpush1.bf16.msra.mxu0 %v736
    %749 = vmatprep.subr.bf16.mxu0 0
    %750 = vmatpush1.bf16.msra.mxu0 %v737
    %751 = vmatprep.subr.bf16.mxu0 0
    %752 = vmatpush1.bf16.msra.mxu0 %v738
    %753 = vmatprep.subr.bf16.mxu0 0
    %754 = vmatpush1.bf16.msra.mxu0 %v739
    %755 = vmatprep.subr.bf16.mxu0 0
    %756 = vmatpush1.bf16.msra.mxu0 0
    %757 = vmatprep.subr.bf16.mxu0 0
    %758 = vmatpush1.bf16.msra.mxu0 0
    %759 = vmatprep.subr.bf16.mxu0 0
    %760 = vmatpush1.bf16.msra.mxu0 0
    %761 = vmatprep.subr.bf16.mxu0 0
    %762 = vmatpush1.bf16.msra.mxu0 0
    %763 = vmatprep.subr.bf16.mxu0 0
    %764 = vmatpush1.bf16.msra.mxu0 0
    %765 = vmatprep.subr.bf16.mxu0 0
    %766 = vmatpush1.bf16.msra.mxu0 0
    %767 = vmatprep.subr.bf16.mxu0 0
    %768 = vmatpush1.bf16.msra.mxu0 0
    %769 = vmatprep.subr.bf16.mxu0 0
    %770 = vmatpush1.bf16.msra.mxu0 0
    %771 = vmatprep.subr.bf16.mxu0 0
    %772 = vmatpush1.bf16.msra.mxu0 0
    %773 = vmatprep.subr.bf16.mxu0 0
    %774 = vmatpush1.bf16.msra.mxu0 0
    %775 = vmatprep.subr.bf16.mxu0 0
    %776 = vmatpush1.bf16.msra.mxu0 0
    %777 = vmatprep.subr.bf16.mxu0 0
    %778 = vmatpush1.bf16.msra.mxu0 0
    %779 = vmatprep.mubr.bf16.mxu0 0
    %780 = vmatmul.mubr.bf16.gmra.mrb[0].mxu0 %v745
    %v781 = vpop.f32.mrb[0].mxu0
    %v782 = vadd.f32 0.0, %v781
    %v783 = vpop.f32.mrb[0].mxu0
    %v784 = vpop.f32.mrb[0].mxu0
    %v785 = vadd.f32 0.0, %v784
    %v786 = vpop.f32.mrb[0].mxu0
    %787 = vdwg.mxu0
    %v796 = vunpack.c.l.b16 %v682
    %v797 = vunpack.c.l.b16 %v683
    %v798 = vunpack.c.l.b16 %v684
    %v799 = vunpack.c.l.b16 %v685
    %v800 = vunpack.c.l.b16 %v686
    %v801 = vunpack.c.l.b16 %v687
    %v802 = vunpack.c.l.b16 %v688
    %v803 = vunpack.c.l.b16 %v689
    %v804 = vpack.c.b16 %v797, %v796
    %v805 = vpack.c.b16 %v799, %v798
    %v806 = vpack.c.b16 %v801, %v800
    %v807 = vpack.c.b16 %v803, %v802
    %v812 = vsel %vm427, %v706, 0
    %814 = vmatprep.subr.bf16.mxu0 0
    %815 = vmatpush1.bf16.msra.mxu0 %v804
    %816 = vmatprep.subr.bf16.mxu0 0
    %817 = vmatpush1.bf16.msra.mxu0 %v805
    %818 = vmatprep.subr.bf16.mxu0 0
    %819 = vmatpush1.bf16.msra.mxu0 %v806
    %820 = vmatprep.subr.bf16.mxu0 0
    %821 = vmatpush1.bf16.msra.mxu0 %v807
    %822 = vmatprep.subr.bf16.mxu0 0
    %823 = vmatpush1.bf16.msra.mxu0 0
    %824 = vmatprep.subr.bf16.mxu0 0
    %825 = vmatpush1.bf16.msra.mxu0 0
    %826 = vmatprep.subr.bf16.mxu0 0
    %827 = vmatpush1.bf16.msra.mxu0 0
    %828 = vmatprep.subr.bf16.mxu0 0
    %829 = vmatpush1.bf16.msra.mxu0 0
    %830 = vmatprep.subr.bf16.mxu0 0
    %831 = vmatpush1.bf16.msra.mxu0 0
    %832 = vmatprep.subr.bf16.mxu0 0
    %833 = vmatpush1.bf16.msra.mxu0 0
    %834 = vmatprep.subr.bf16.mxu0 0
    %835 = vmatpush1.bf16.msra.mxu0 0
    %836 = vmatprep.subr.bf16.mxu0 0
    %837 = vmatpush1.bf16.msra.mxu0 0
    %838 = vmatprep.subr.bf16.mxu0 0
    %839 = vmatpush1.bf16.msra.mxu0 0
    %840 = vmatprep.subr.bf16.mxu0 0
    %841 = vmatpush1.bf16.msra.mxu0 0
    %842 = vmatprep.subr.bf16.mxu0 0
    %843 = vmatpush1.bf16.msra.mxu0 0
    %844 = vmatprep.subr.bf16.mxu0 0
    %845 = vmatpush1.bf16.msra.mxu0 0
    %846 = vmatprep.mubr.bf16.mxu0 0
    %847 = vmatmul.mubr.bf16.gmra.mrb[0].mxu0 %v812
    %v848 = vpop.f32.mrb[0].mxu0
    %v849 = vadd.f32 %v782, %v848
    %v850 = vpop.f32.mrb[0].mxu0
    %v851 = vpop.f32.mrb[0].mxu0
    %v852 = vadd.f32 %v785, %v851
    %v853 = vpop.f32.mrb[0].mxu0
    %854 = vdwg.mxu0
    %v855 = vld [vmem:[#allocation2] sm:$0xe]
    %s856 = scalar_lea.vmem %s5, 160
    %v857 = vld [vmem:[%s856] sm:$0xf]
    %v858 = vld [vmem:[%s856 + $0x4] sm:$0xf]
    %v859 = vld [vmem:[%s856 + $0x8] sm:$0xf]
    %v860 = vld [vmem:[%s856 + $0xc] sm:$0xf]
    %v861 = vld [vmem:[%s856 + $0x10] sm:$0xf]
    %v862 = vld [vmem:[%s856 + $0x14] sm:$0xf]
    %v863 = vld [vmem:[%s856 + $0x18] sm:$0xf]
    %v864 = vld [vmem:[%s856 + $0x1c] sm:$0xf]
    %v866 = vunpack.c.l.b16 %v855
    %v867 = vpack.c.b16 %v704, %v866
    %v868 = vrot.slane %v867, 1
    %v869 = vrot.slane %v707, 1
    %v870 = vsel %vm552, %v868, %v869
    %v879 = vunpack.c.l.b16 %v857
    %v880 = vunpack.c.l.b16 %v858
    %v881 = vunpack.c.l.b16 %v859
    %v882 = vunpack.c.l.b16 %v860
    %v883 = vunpack.c.l.b16 %v861
    %v884 = vunpack.c.l.b16 %v862
    %v885 = vunpack.c.l.b16 %v863
    %v886 = vunpack.c.l.b16 %v864
    %v887 = vpack.c.b16 %v880, %v879
    %v888 = vpack.c.b16 %v882, %v881
    %v889 = vpack.c.b16 %v884, %v883
    %v890 = vpack.c.b16 %v886, %v885
    %v896 = vsel %vm427, %v870, 0
    %898 = vmatprep.subr.bf16.mxu0 0
    %899 = vmatpush1.bf16.msra.mxu0 %v887
    %900 = vmatprep.subr.bf16.mxu0 0
    %901 = vmatpush1.bf16.msra.mxu0 %v888
    %902 = vmatprep.subr.bf16.mxu0 0
    %903 = vmatpush1.bf16.msra.mxu0 %v889
    %904 = vmatprep.subr.bf16.mxu0 0
    %905 = vmatpush1.bf16.msra.mxu0 %v890
    %906 = vmatprep.subr.bf16.mxu0 0
    %907 = vmatpush1.bf16.msra.mxu0 0
    %908 = vmatprep.subr.bf16.mxu0 0
    %909 = vmatpush1.bf16.msra.mxu0 0
    %910 = vmatprep.subr.bf16.mxu0 0
    %911 = vmatpush1.bf16.msra.mxu0 0
    %912 = vmatprep.subr.bf16.mxu0 0
    %913 = vmatpush1.bf16.msra.mxu0 0
    %914 = vmatprep.subr.bf16.mxu0 0
    %915 = vmatpush1.bf16.msra.mxu0 0
    %916 = vmatprep.subr.bf16.mxu0 0
    %917 = vmatpush1.bf16.msra.mxu0 0
    %918 = vmatprep.subr.bf16.mxu0 0
    %919 = vmatpush1.bf16.msra.mxu0 0
    %920 = vmatprep.subr.bf16.mxu0 0
    %921 = vmatpush1.bf16.msra.mxu0 0
    %922 = vmatprep.subr.bf16.mxu0 0
    %923 = vmatpush1.bf16.msra.mxu0 0
    %924 = vmatprep.subr.bf16.mxu0 0
    %925 = vmatpush1.bf16.msra.mxu0 0
    %926 = vmatprep.subr.bf16.mxu0 0
    %927 = vmatpush1.bf16.msra.mxu0 0
    %928 = vmatprep.subr.bf16.mxu0 0
    %929 = vmatpush1.bf16.msra.mxu0 0
    %930 = vmatprep.mubr.bf16.mxu0 0
    %931 = vmatmul.mubr.bf16.gmra.mrb[0].mxu0 %v896
    %v932 = vpop.f32.mrb[0].mxu0
    %v933 = vadd.f32 0.0, %v932
    %v934 = vpop.f32.mrb[0].mxu0
    %v935 = vpop.f32.mrb[0].mxu0
    %v936 = vadd.f32 0.0, %v935
    %v937 = vpop.f32.mrb[0].mxu0
    %938 = vdwg.mxu0
    %v939 = vadd.f32 %v849, %v933
    %v940 = vadd.f32 %v852, %v936
    %s941 = scalar_lea.vmem %s6, 1
    %v942 = vld [vmem:[%s941] sm:$0x1]
    %v944 = vlaneseq
    %v945 = vshrl.u32 %v944, 7
    %v946 = vsub.s32 0, %v945
    %v947 = vrot.slane %v942, %v946
    %v949 = vadd.f32 %v939, %v947
    %v950 = vadd.f32 %v940, %v947
    %v951 = vsub.f32 0.0, %v949
    %v952 = vsub.f32 0.0, %v950
    %v953 = vmul.f32 %v951, 1.442695
    %v954 = vpow.pop %v953
    %v955 = vmul.f32 %v952, 1.442695
    %v956 = vpow.pop %v955
    %v957 = vadd.f32 %v954, 1.0
    %v958 = vadd.f32 %v956, 1.0
    %v959 = vrcp.pop %v957
    %v960 = vrcp.pop %v958
    %v961 = vmul.f32 %v949, %v959
    %v962 = vmul.f32 %v950, %v960
    %v963 = vpack.c.bf16 %v199, %v198
    %v964 = vld [vmem:[%s7] sm:$0xf]
    %v965 = vld [vmem:[%s7 + $0x4] sm:$0xf]
    %v966 = vld [vmem:[%s7 + $0x8] sm:$0xf]
    %v967 = vld [vmem:[%s7 + $0xc] sm:$0xf]
    %v968 = vld [vmem:[%s7 + $0x10] sm:$0xf]
    %v969 = vld [vmem:[%s7 + $0x14] sm:$0xf]
    %v970 = vld [vmem:[%s7 + $0x18] sm:$0xf]
    %v971 = vld [vmem:[%s7 + $0x1c] sm:$0xf]
    %s972 = scalar_lea.vmem %s7, 32
    %v973 = vld [vmem:[%s972] sm:$0xf]
    %v974 = vld [vmem:[%s972 + $0x4] sm:$0xf]
    %v975 = vld [vmem:[%s972 + $0x8] sm:$0xf]
    %v976 = vld [vmem:[%s972 + $0xc] sm:$0xf]
    %v977 = vld [vmem:[%s972 + $0x10] sm:$0xf]
    %v978 = vld [vmem:[%s972 + $0x14] sm:$0xf]
    %v979 = vld [vmem:[%s972 + $0x18] sm:$0xf]
    %v980 = vld [vmem:[%s972 + $0x1c] sm:$0xf]
    %v989 = vunpack.c.l.b16 %v973
    %v990 = vunpack.c.l.b16 %v974
    %v991 = vunpack.c.l.b16 %v975
    %v992 = vunpack.c.l.b16 %v976
    %v993 = vunpack.c.l.b16 %v977
    %v994 = vunpack.c.l.b16 %v978
    %v995 = vunpack.c.l.b16 %v979
    %v996 = vunpack.c.l.b16 %v980
    %v997 = vpack.c.b16 %v990, %v989
    %v998 = vpack.c.b16 %v992, %v991
    %v999 = vpack.c.b16 %v994, %v993
    %v1000 = vpack.c.b16 %v996, %v995
    %v1006 = vsel %vm427, %v324, 0
    %1008 = vmatprep.subr.bf16.mxu0 0
    %1009 = vmatpush1.bf16.msra.mxu0 %v997
    %1010 = vmatprep.subr.bf16.mxu0 0
    %1011 = vmatpush1.bf16.msra.mxu0 %v998
    %1012 = vmatprep.subr.bf16.mxu0 0
    %1013 = vmatpush1.bf16.msra.mxu0 %v999
    %1014 = vmatprep.subr.bf16.mxu0 0
    %1015 = vmatpush1.bf16.msra.mxu0 %v1000
    %1016 = vmatprep.subr.bf16.mxu0 0
    %1017 = vmatpush1.bf16.msra.mxu0 0
    %1018 = vmatprep.subr.bf16.mxu0 0
    %1019 = vmatpush1.bf16.msra.mxu0 0
    %1020 = vmatprep.subr.bf16.mxu0 0
    %1021 = vmatpush1.bf16.msra.mxu0 0
    %1022 = vmatprep.subr.bf16.mxu0 0
    %1023 = vmatpush1.bf16.msra.mxu0 0
    %1024 = vmatprep.subr.bf16.mxu0 0
    %1025 = vmatpush1.bf16.msra.mxu0 0
    %1026 = vmatprep.subr.bf16.mxu0 0
    %1027 = vmatpush1.bf16.msra.mxu0 0
    %1028 = vmatprep.subr.bf16.mxu0 0
    %1029 = vmatpush1.bf16.msra.mxu0 0
    %1030 = vmatprep.subr.bf16.mxu0 0
    %1031 = vmatpush1.bf16.msra.mxu0 0
    %1032 = vmatprep.subr.bf16.mxu0 0
    %1033 = vmatpush1.bf16.msra.mxu0 0
    %1034 = vmatprep.subr.bf16.mxu0 0
    %1035 = vmatpush1.bf16.msra.mxu0 0
    %1036 = vmatprep.subr.bf16.mxu0 0
    %1037 = vmatpush1.bf16.msra.mxu0 0
    %1038 = vmatprep.subr.bf16.mxu0 0
    %1039 = vmatpush1.bf16.msra.mxu0 0
    %1040 = vmatprep.mubr.bf16.mxu0 0
    %1041 = vmatmul.mubr.bf16.gmra.mrb[0].mxu0 %v1006
    %v1042 = vpop.f32.mrb[0].mxu0
    %v1043 = vadd.f32 0.0, %v1042
    %v1044 = vpop.f32.mrb[0].mxu0
    %v1045 = vpop.f32.mrb[0].mxu0
    %v1046 = vadd.f32 0.0, %v1045
    %v1047 = vpop.f32.mrb[0].mxu0
    %1048 = vdwg.mxu0
    %v1057 = vunpack.c.l.b16 %v964
    %v1058 = vunpack.c.l.b16 %v965
    %v1059 = vunpack.c.l.b16 %v966
    %v1060 = vunpack.c.l.b16 %v967
    %v1061 = vunpack.c.l.b16 %v968
    %v1062 = vunpack.c.l.b16 %v969
    %v1063 = vunpack.c.l.b16 %v970
    %v1064 = vunpack.c.l.b16 %v971
    %v1065 = vpack.c.b16 %v1058, %v1057
    %v1066 = vpack.c.b16 %v1060, %v1059
    %v1067 = vpack.c.b16 %v1062, %v1061
    %v1068 = vpack.c.b16 %v1064, %v1063
    %v1074 = vsel %vm427, %v963, 0
    %1076 = vmatprep.subr.bf16.mxu0 0
    %1077 = vmatpush1.bf16.msra.mxu0 %v1065
    %1078 = vmatprep.subr.bf16.mxu0 0
    %1079 = vmatpush1.bf16.msra.mxu0 %v1066
    %1080 = vmatprep.subr.bf16.mxu0 0
    %1081 = vmatpush1.bf16.msra.mxu0 %v1067
    %1082 = vmatprep.subr.bf16.mxu0 0
    %1083 = vmatpush1.bf16.msra.mxu0 %v1068
    %1084 = vmatprep.subr.bf16.mxu0 0
    %1085 = vmatpush1.bf16.msra.mxu0 0
    %1086 = vmatprep.subr.bf16.mxu0 0
    %1087 = vmatpush1.bf16.msra.mxu0 0
    %1088 = vmatprep.subr.bf16.mxu0 0
    %1089 = vmatpush1.bf16.msra.mxu0 0
    %1090 = vmatprep.subr.bf16.mxu0 0
    %1091 = vmatpush1.bf16.msra.mxu0 0
    %1092 = vmatprep.subr.bf16.mxu0 0
    %1093 = vmatpush1.bf16.msra.mxu0 0
    %1094 = vmatprep.subr.bf16.mxu0 0
    %1095 = vmatpush1.bf16.msra.mxu0 0
    %1096 = vmatprep.subr.bf16.mxu0 0
    %1097 = vmatpush1.bf16.msra.mxu0 0
    %1098 = vmatprep.subr.bf16.mxu0 0
    %1099 = vmatpush1.bf16.msra.mxu0 0
    %1100 = vmatprep.subr.bf16.mxu0 0
    %1101 = vmatpush1.bf16.msra.mxu0 0
    %1102 = vmatprep.subr.bf16.mxu0 0
    %1103 = vmatpush1.bf16.msra.mxu0 0
    %1104 = vmatprep.subr.bf16.mxu0 0
    %1105 = vmatpush1.bf16.msra.mxu0 0
    %1106 = vmatprep.subr.bf16.mxu0 0
    %1107 = vmatpush1.bf16.msra.mxu0 0
    %1108 = vmatprep.mubr.bf16.mxu0 0
    %1109 = vmatmul.mubr.bf16.gmra.mrb[0].mxu0 %v1074
    %v1110 = vpop.f32.mrb[0].mxu0
    %v1111 = vadd.f32 %v1043, %v1110
    %v1112 = vpop.f32.mrb[0].mxu0
    %v1113 = vpop.f32.mrb[0].mxu0
    %v1114 = vadd.f32 %v1046, %v1113
    %v1115 = vpop.f32.mrb[0].mxu0
    %1116 = vdwg.mxu0
    %v1117 = vpack.c.bf16 %v962, %v961
    %s1118 = scalar_lea.vmem %s7, 64
    %v1119 = vld [vmem:[%s1118] sm:$0xf]
    %v1120 = vld [vmem:[%s1118 + $0x4] sm:$0xf]
    %v1121 = vld [vmem:[%s1118 + $0x8] sm:$0xf]
    %v1122 = vld [vmem:[%s1118 + $0xc] sm:$0xf]
    %v1123 = vld [vmem:[%s1118 + $0x10] sm:$0xf]
    %v1124 = vld [vmem:[%s1118 + $0x14] sm:$0xf]
    %v1125 = vld [vmem:[%s1118 + $0x18] sm:$0xf]
    %v1126 = vld [vmem:[%s1118 + $0x1c] sm:$0xf]
    %v1135 = vunpack.c.l.b16 %v1119
    %v1136 = vunpack.c.l.b16 %v1120
    %v1137 = vunpack.c.l.b16 %v1121
    %v1138 = vunpack.c.l.b16 %v1122
    %v1139 = vunpack.c.l.b16 %v1123
    %v1140 = vunpack.c.l.b16 %v1124
    %v1141 = vunpack.c.l.b16 %v1125
    %v1142 = vunpack.c.l.b16 %v1126
    %v1143 = vpack.c.b16 %v1136, %v1135
    %v1144 = vpack.c.b16 %v1138, %v1137
    %v1145 = vpack.c.b16 %v1140, %v1139
    %v1146 = vpack.c.b16 %v1142, %v1141
    %v1152 = vsel %vm427, %v1117, 0
    %1154 = vmatprep.subr.bf16.mxu0 0
    %1155 = vmatpush1.bf16.msra.mxu0 %v1143
    %1156 = vmatprep.subr.bf16.mxu0 0
    %1157 = vmatpush1.bf16.msra.mxu0 %v1144
    %1158 = vmatprep.subr.bf16.mxu0 0
    %1159 = vmatpush1.bf16.msra.mxu0 %v1145
    %1160 = vmatprep.subr.bf16.mxu0 0
    %1161 = vmatpush1.bf16.msra.mxu0 %v1146
    %1162 = vmatprep.subr.bf16.mxu0 0
    %1163 = vmatpush1.bf16.msra.mxu0 0
    %1164 = vmatprep.subr.bf16.mxu0 0
    %1165 = vmatpush1.bf16.msra.mxu0 0
    %1166 = vmatprep.subr.bf16.mxu0 0
    %1167 = vmatpush1.bf16.msra.mxu0 0
    %1168 = vmatprep.subr.bf16.mxu0 0
    %1169 = vmatpush1.bf16.msra.mxu0 0
    %1170 = vmatprep.subr.bf16.mxu0 0
    %1171 = vmatpush1.bf16.msra.mxu0 0
    %1172 = vmatprep.subr.bf16.mxu0 0
    %1173 = vmatpush1.bf16.msra.mxu0 0
    %1174 = vmatprep.subr.bf16.mxu0 0
    %1175 = vmatpush1.bf16.msra.mxu0 0
    %1176 = vmatprep.subr.bf16.mxu0 0
    %1177 = vmatpush1.bf16.msra.mxu0 0
    %1178 = vmatprep.subr.bf16.mxu0 0
    %1179 = vmatpush1.bf16.msra.mxu0 0
    %1180 = vmatprep.subr.bf16.mxu0 0
    %1181 = vmatpush1.bf16.msra.mxu0 0
    %1182 = vmatprep.subr.bf16.mxu0 0
    %1183 = vmatpush1.bf16.msra.mxu0 0
    %1184 = vmatprep.subr.bf16.mxu0 0
    %1185 = vmatpush1.bf16.msra.mxu0 0
    %1186 = vmatprep.mubr.bf16.mxu0 0
    %1187 = vmatmul.mubr.bf16.gmra.mrb[0].mxu0 %v1152
    %v1188 = vpop.f32.mrb[0].mxu0
    %v1189 = vadd.f32 0.0, %v1188
    %v1190 = vpop.f32.mrb[0].mxu0
    %v1191 = vpop.f32.mrb[0].mxu0
    %v1192 = vadd.f32 0.0, %v1191
    %v1193 = vpop.f32.mrb[0].mxu0
    %1194 = vdwg.mxu0
    %v1195 = vadd.f32 %v1111, %v1189
    %v1196 = vadd.f32 %v1114, %v1192
    %v1197 = vld [vmem:[%s8] sm:$0x1]
    %v1199 = vlaneseq
    %v1200 = vshrl.u32 %v1199, 7
    %v1201 = vsub.s32 0, %v1200
    %v1202 = vrot.slane %v1197, %v1201
    %v1204 = vadd.f32 %v1195, %v1202
    %v1205 = vadd.f32 %v1196, %v1202
    %v1206 = vsub.f32 0.0, %v1204
    %v1207 = vsub.f32 0.0, %v1205
    %v1208 = vmul.f32 %v1206, 1.442695
    %v1209 = vpow.pop %v1208
    %v1210 = vmul.f32 %v1207, 1.442695
    %v1211 = vpow.pop %v1210
    %v1212 = vadd.f32 %v1209, 1.0
    %v1213 = vadd.f32 %v1211, 1.0
    %v1214 = vrcp.pop %v1212
    %v1215 = vrcp.pop %v1213
    %v1216 = vmul.f32 %v1204, %v1214
    %v1217 = vmul.f32 %v1205, %v1215
    %1218 = vst [vmem:[%s9] sm:$0xff] %v1216
    %1219 = vst [vmem:[%s9 + $0x8] sm:$0xff] %v1217
    // Predicated region
    $region46: #{c2f_forward.1} parent=1 // pred_check
      _
    $region47: #{c2f_forward.1} parent=1 // pred_check_branch
      %1221 = sbr.rel (0) target = $region49
    $region48: #{c2f_forward.1} parent=1 // pred_region
      _
    $region49: #{c2f_forward.1} parent=1 // pred_fallthru
      _
    // Predicated region
    $region50: #{c2f_forward.1} parent=1 // pred_check
      _
    $region51: #{c2f_forward.1} parent=1 // pred_check_branch
      %1223 = sbr.rel (0) target = $region53
    $region52: #{c2f_forward.1} parent=1 // pred_region
      _
    $region53: #{c2f_forward.1} parent=1 // pred_fallthru
      _
    %1224 = vsyncpa [#allocation4], 1
    %1225 = vsyncpa [#allocation6], 1

</llo_original>
